<compile_context>
chip_gen: v7x
topology: tpu7x:2x2x1
jax: 0.10.0
libtpu: 0.0.40
codegen_flags: <defaults>
</compile_context>

<pallas_src>
import jax
import jax.numpy as jnp
from jax.experimental import pallas as pl
from jax.experimental.pallas import tpu as pltpu  # noqa: F401  (TPU backend)


def input_proj_kernel(x_ref, w_ref, b_ref, gi_ref):
    """gi = x @ W_ih^T + b_proj as one big MXU matmul.

    x: (SL*B, I), w: (I, 3H), b: (1, 3H)  ->  gi: (SL*B, 3H)
    """
    gi_ref[...] = (
        jnp.dot(x_ref[...], w_ref[...], preferred_element_type=jnp.float32)
        + b_ref[...]
    ).astype(gi_ref.dtype)


def gru_recurrence_kernel(gi_r_ref, gi_z_ref, gi_n_ref, h0_ref,
                          w_r_ref, w_z_ref, w_n_ref, b_hn_ref,
                          out_ref, hn_ref):
    """Sequential GRU recurrence, entire sequence in one kernel invocation.

    gi_*: (SL, B, H) precomputed input projections (biases folded as needed)
    h0  : (1, B, H);  w_*: (H, H) transposed per-gate recurrent weights
    b_hn: (1, H)   (must stay inside the recurrence: n uses r * (h@W_hn + b_hn))
    out : (SL, B, H);  hn: (1, B, H)
    """
    seq_len = out_ref.shape[0]

    # Loop-invariant loads hoisted out of the serial loop (weights + bias
    # broadcast are read once; JAX does not CSE broadcasts inside the loop).
    w_r = w_r_ref[...]
    w_z = w_z_ref[...]
    w_n = w_n_ref[...]
    b_hn = b_hn_ref[...]            # (1, H) -> broadcasts over B

    def step(t, h):
        h_r = jnp.dot(h, w_r, preferred_element_type=jnp.float32)
        h_z = jnp.dot(h, w_z, preferred_element_type=jnp.float32)
        h_n = jnp.dot(h, w_n, preferred_element_type=jnp.float32) + b_hn
        r = jax.nn.sigmoid(gi_r_ref[t] + h_r)
        z = jax.nn.sigmoid(gi_z_ref[t] + h_z)
        n = jnp.tanh(gi_n_ref[t] + r * h_n)
        h_new = (1.0 - z) * n + z * h
        out_ref[t] = h_new.astype(out_ref.dtype)   # VMEM store; one HBM writeback
        return h_new

    h_final = jax.lax.fori_loop(
        0, seq_len, step, h0_ref[0].astype(jnp.float32), unroll=True)
    hn_ref[0] = h_final.astype(hn_ref.dtype)


def encoder_rnn_forward(x, h0, w_ih, w_hh, b_ih, b_hh):
    """GRU forward.  x: (SL, B, I); h0: (1, B, H); PyTorch-layout weights:
    w_ih: (3H, I), w_hh: (3H, H), b_ih/b_hh: (3H,).  Gate order is [r, z, n]."""
    SL, B, I = x.shape
    H = h0.shape[-1]
    f32 = jnp.float32

    w_ih = jnp.asarray(w_ih, f32)   # (3H, I)
    w_hh = jnp.asarray(w_hh, f32)   # (3H, H)
    b_ih = jnp.asarray(b_ih, f32)   # (3H,)
    b_hh = jnp.asarray(b_hh, f32)   # (3H,)

    # Bias folding: b_hr / b_hz commute out of the recurrence -> fold into the
    # projection bias.  b_hn must stay inside (it is multiplied by r).
    b_proj = jnp.concatenate(
        [b_ih[: 2 * H] + b_hh[: 2 * H], b_ih[2 * H:]]).reshape(1, 3 * H)
    b_hn = b_hh[2 * H:].reshape(1, H)

    # ---- Phase 1: hoisted input projection (one big MXU matmul). ----
    x2d = x.reshape(SL * B, I).astype(f32)
    gi = pl.pallas_call(
        input_proj_kernel,
        out_shape=jax.ShapeDtypeStruct((SL * B, 3 * H), f32),
    )(x2d, w_ih.T, b_proj)

    # Layout plumbing (XLA, off the serial path): per-gate, sequence-major,
    # last dim = H so nothing inside the recurrent loop slices across lanes.
    gi = gi.reshape(SL, B, 3, H)
    gi_r = gi[:, :, 0, :]
    gi_z = gi[:, :, 1, :]
    gi_n = gi[:, :, 2, :]

    # Per-gate transposed recurrent weights (gate order r, z, n).
    w_hr = w_hh[0:H, :].T
    w_hz = w_hh[H:2 * H, :].T
    w_hn = w_hh[2 * H:, :].T

    # ---- Phase 2: sequential recurrence, single kernel invocation. ----
    outputs, hidden = pl.pallas_call(
        gru_recurrence_kernel,
        out_shape=(
            jax.ShapeDtypeStruct((SL, B, H), x.dtype),
            jax.ShapeDtypeStruct((1, B, H), x.dtype),
        ),
    )(gi_r, gi_z, gi_n, h0.astype(f32), w_hr, w_hz, w_hn, b_hn)
    return outputs, hidden


def gru_reference(x, h0, w_ih, w_hh, b_ih, b_hh):
    """Plain-JAX reference matching torch.nn.GRU semantics (gate order r,z,n)."""
    H = h0.shape[-1]

    def step(h, x_t):
        gi = x_t @ w_ih.T + b_ih
        gh = h @ w_hh.T + b_hh
        i_r, i_z, i_n = gi[:, :H], gi[:, H:2 * H], gi[:, 2 * H:]
        h_r, h_z, h_n = gh[:, :H], gh[:, H:2 * H], gh[:, 2 * H:]
        r = jax.nn.sigmoid(i_r + h_r)
        z = jax.nn.sigmoid(i_z + h_z)
        n = jnp.tanh(i_n + r * h_n)
        h_new = (1.0 - z) * n + z * h
        return h_new, h_new

    h_final, outs = jax.lax.scan(step, h0[0], x)
    return outs, h_final[None]


if __name__ == "__main__":
    SL, B, I, H = 8, 8, 16, 32

    key = jax.random.PRNGKey(0)
    k_x, k_h, k1, k2, k3, k4 = jax.random.split(key, 6)

    x = jax.random.normal(k_x, (SL, B, I), dtype=jnp.float32)
    h0 = jax.random.normal(k_h, (1, B, H), dtype=jnp.float32)

    # PyTorch nn.GRU init: uniform(-1/sqrt(H), 1/sqrt(H))
    bound = 1.0 / (H ** 0.5)
    w_ih = jax.random.uniform(k1, (3 * H, I), jnp.float32, -bound, bound)
    w_hh = jax.random.uniform(k2, (3 * H, H), jnp.float32, -bound, bound)
    b_ih = jax.random.uniform(k3, (3 * H,), jnp.float32, -bound, bound)
    b_hh = jax.random.uniform(k4, (3 * H,), jnp.float32, -bound, bound)

    fwd = jax.jit(encoder_rnn_forward)
    outputs, hidden = fwd(x, h0, w_ih, w_hh, b_ih, b_hh)
    jax.block_until_ready((outputs, hidden))

    ref_out, ref_hid = gru_reference(x, h0, w_ih, w_hh, b_ih, b_hh)
    assert outputs.shape == (SL, B, H) and hidden.shape == (1, B, H)
    assert jnp.allclose(outputs, ref_out, atol=1e-4, rtol=1e-4)
    assert jnp.allclose(hidden, ref_hid, atol=1e-4, rtol=1e-4)

    print("KERNEL_OK")
</pallas_src>

<mosaic_0001>
module attributes {stable_mosaic.version = 11 : i64} {
  func.func @input_proj_kernel(%arg0: memref<64x16xf32, #tpu.memory_space<vmem>>, %arg1: memref<16x96xf32, #tpu.memory_space<vmem>>, %arg2: memref<1x96xf32, #tpu.memory_space<vmem>>, %arg3: memref<64x96xf32, #tpu.memory_space<vmem>>) attributes {dimension_semantics = [], scalar_prefetch = 0 : i64, scratch_operands = 0 : i64, tpu.core_type = #tpu.core_type<tc>} {
    %c0 = arith.constant 0 : index
    %c0_0 = arith.constant 0 : index
    %0 = vector.load %arg0[%c0, %c0_0] : memref<64x16xf32, #tpu.memory_space<vmem>>, vector<64x16xf32>
    %c0_1 = arith.constant 0 : index
    %c0_2 = arith.constant 0 : index
    %1 = vector.load %arg1[%c0_1, %c0_2] : memref<16x96xf32, #tpu.memory_space<vmem>>, vector<16x96xf32>
    %cst = arith.constant dense<0.000000e+00> : vector<64x96xf32>
    %2 = tpu.matmul %0, %1, %cst {dimension_numbers = #tpu.dot_dimension_numbers<[1], [0], [0], [1], [0, 0, 1, 1], [], []>} : vector<64x16xf32>, vector<16x96xf32>, vector<64x96xf32> -> vector<64x96xf32>
    %c0_3 = arith.constant 0 : index
    %c0_4 = arith.constant 0 : index
    %3 = vector.load %arg2[%c0_3, %c0_4] : memref<1x96xf32, #tpu.memory_space<vmem>>, vector<1x96xf32>
    %4 = vector.broadcast %3 : vector<1x96xf32> to vector<64x96xf32>
    %5 = arith.addf %2, %4 : vector<64x96xf32>
    %c0_5 = arith.constant 0 : index
    %c0_6 = arith.constant 0 : index
    %6 = vector.load %arg3[%c0_5, %c0_6] : memref<64x96xf32, #tpu.memory_space<vmem>>, vector<64x96xf32>
    tpu.vector_store %arg3[%c0_5, %c0_6], %5 {strides = array<i32>} : memref<64x96xf32, #tpu.memory_space<vmem>>, vector<64x96xf32>,
    return
  }
}

module attributes {stable_mosaic.version = 11 : i64} {
  func.func @gru_recurrence_kernel(%arg0: memref<8x8x32xf32, #tpu.memory_space<vmem>>, %arg1: memref<8x8x32xf32, #tpu.memory_space<vmem>>, %arg2: memref<8x8x32xf32, #tpu.memory_space<vmem>>, %arg3: memref<1x8x32xf32, #tpu.memory_space<vmem>>, %arg4: memref<32x32xf32, #tpu.memory_space<vmem>>, %arg5: memref<32x32xf32, #tpu.memory_space<vmem>>, %arg6: memref<32x32xf32, #tpu.memory_space<vmem>>, %arg7: memref<1x32xf32, #tpu.memory_space<vmem>>, %arg8: memref<8x8x32xf32, #tpu.memory_space<vmem>>, %arg9: memref<1x8x32xf32, #tpu.memory_space<vmem>>) attributes {dimension_semantics = [], scalar_prefetch = 0 : i64, scratch_operands = 0 : i64, tpu.core_type = #tpu.core_type<tc>} {
    %c0 = arith.constant 0 : index
    %c0_0 = arith.constant 0 : index
    %0 = vector.load %arg4[%c0, %c0_0] : memref<32x32xf32, #tpu.memory_space<vmem>>, vector<32x32xf32>
    %c0_1 = arith.constant 0 : index
    %c0_2 = arith.constant 0 : index
    %1 = vector.load %arg5[%c0_1, %c0_2] : memref<32x32xf32, #tpu.memory_space<vmem>>, vector<32x32xf32>
    %c0_3 = arith.constant 0 : index
    %c0_4 = arith.constant 0 : index
    %2 = vector.load %arg6[%c0_3, %c0_4] : memref<32x32xf32, #tpu.memory_space<vmem>>, vector<32x32xf32>
    %c0_5 = arith.constant 0 : index
    %c0_6 = arith.constant 0 : index
    %3 = vector.load %arg7[%c0_5, %c0_6] : memref<1x32xf32, #tpu.memory_space<vmem>>, vector<1x32xf32>
    %c0_7 = arith.constant 0 : index
    %c0_8 = arith.constant 0 : index
    %c0_9 = arith.constant 0 : index
    %4 = vector.load %arg3[%c0_7, %c0_8, %c0_9] : memref<1x8x32xf32, #tpu.memory_space<vmem>>, vector<1x8x32xf32>
    %5 = vector.shape_cast %4 : vector<1x8x32xf32> to vector<8x32xf32>
    %c0_i32 = arith.constant 0 : i32
    %cst = arith.constant dense<0.000000e+00> : vector<8x32xf32>
    %6 = tpu.matmul %5, %0, %cst {dimension_numbers = #tpu.dot_dimension_numbers<[1], [0], [0], [1], [0, 0, 1, 1], [], []>} : vector<8x32xf32>, vector<32x32xf32>, vector<8x32xf32> -> vector<8x32xf32>
    %cst_10 = arith.constant dense<0.000000e+00> : vector<8x32xf32>
    %7 = tpu.matmul %5, %1, %cst_10 {dimension_numbers = #tpu.dot_dimension_numbers<[1], [0], [0], [1], [0, 0, 1, 1], [], []>} : vector<8x32xf32>, vector<32x32xf32>, vector<8x32xf32> -> vector<8x32xf32>
    %cst_11 = arith.constant dense<0.000000e+00> : vector<8x32xf32>
    %8 = tpu.matmul %5, %2, %cst_11 {dimension_numbers = #tpu.dot_dimension_numbers<[1], [0], [0], [1], [0, 0, 1, 1], [], []>} : vector<8x32xf32>, vector<32x32xf32>, vector<8x32xf32> -> vector<8x32xf32>
    %9 = vector.broadcast %3 : vector<1x32xf32> to vector<8x32xf32>
    %10 = arith.addf %8, %9 : vector<8x32xf32>
    %11 = arith.index_cast %c0_i32 : i32 to index
    %c0_12 = arith.constant 0 : index
    %c0_13 = arith.constant 0 : index
    %12 = vector.load %arg0[%11, %c0_12, %c0_13] : memref<8x8x32xf32, #tpu.memory_space<vmem>>, vector<1x8x32xf32>
    %13 = vector.shape_cast %12 : vector<1x8x32xf32> to vector<8x32xf32>
    %14 = arith.addf %13, %6 : vector<8x32xf32>
    %15 = arith.negf %14 : vector<8x32xf32>
    %16 = math.exp %15 : vector<8x32xf32>
    %cst_14 = arith.constant 1.000000e+00 : f32
    %17 = vector.broadcast %cst_14 : f32 to vector<8x32xf32>
    %18 = arith.addf %17, %16 : vector<8x32xf32>
    %19 = arith.divf %17, %18 : vector<8x32xf32>
    %20 = arith.index_cast %c0_i32 : i32 to index
    %c0_15 = arith.constant 0 : index
    %c0_16 = arith.constant 0 : index
    %21 = vector.load %arg1[%20, %c0_15, %c0_16] : memref<8x8x32xf32, #tpu.memory_space<vmem>>, vector<1x8x32xf32>
    %22 = vector.shape_cast %21 : vector<1x8x32xf32> to vector<8x32xf32>
    %23 = arith.addf %22, %7 : vector<8x32xf32>
    %24 = arith.negf %23 : vector<8x32xf32>
    %25 = math.exp %24 : vector<8x32xf32>
    %cst_17 = arith.constant 1.000000e+00 : f32
    %26 = vector.broadcast %cst_17 : f32 to vector<8x32xf32>
    %27 = arith.addf %26, %25 : vector<8x32xf32>
    %28 = arith.divf %26, %27 : vector<8x32xf32>
    %29 = arith.index_cast %c0_i32 : i32 to index
    %c0_18 = arith.constant 0 : index
    %c0_19 = arith.constant 0 : index
    %30 = vector.load %arg2[%29, %c0_18, %c0_19] : memref<8x8x32xf32, #tpu.memory_space<vmem>>, vector<1x8x32xf32>
    %31 = vector.shape_cast %30 : vector<1x8x32xf32> to vector<8x32xf32>
    %32 = arith.mulf %19, %10 : vector<8x32xf32>
    %33 = arith.addf %31, %32 : vector<8x32xf32>
    %34 = math.tanh %33 : vector<8x32xf32>
    %cst_20 = arith.constant 1.000000e+00 : f32
    %35 = vector.broadcast %cst_20 : f32 to vector<8x32xf32>
    %36 = arith.subf %35, %28 : vector<8x32xf32>
    %37 = arith.mulf %36, %34 : vector<8x32xf32>
    %38 = arith.mulf %28, %5 : vector<8x32xf32>
    %39 = arith.addf %37, %38 : vector<8x32xf32>
    %40 = arith.index_cast %c0_i32 : i32 to index
    %c0_21 = arith.constant 0 : index
    %c0_22 = arith.constant 0 : index
    %41 = vector.load %arg8[%40, %c0_21, %c0_22] : memref<8x8x32xf32, #tpu.memory_space<vmem>>, vector<1x8x32xf32>
    %42 = vector.shape_cast %41 : vector<1x8x32xf32> to vector<8x32xf32>
    %43 = vector.shape_cast %39 : vector<8x32xf32> to vector<1x8x32xf32>
    tpu.vector_store %arg8[%40, %c0_21, %c0_22], %43 {strides = array<i32>} : memref<8x8x32xf32, #tpu.memory_space<vmem>>, vector<1x8x32xf32>,
    %c1_i32 = arith.constant 1 : i32
    %cst_23 = arith.constant dense<0.000000e+00> : vector<8x32xf32>
    %44 = tpu.matmul %39, %0, %cst_23 {dimension_numbers = #tpu.dot_dimension_numbers<[1], [0], [0], [1], [0, 0, 1, 1], [], []>} : vector<8x32xf32>, vector<32x32xf32>, vector<8x32xf32> -> vector<8x32xf32>
    %cst_24 = arith.constant dense<0.000000e+00> : vector<8x32xf32>
    %45 = tpu.matmul %39, %1, %cst_24 {dimension_numbers = #tpu.dot_dimension_numbers<[1], [0], [0], [1], [0, 0, 1, 1], [], []>} : vector<8x32xf32>, vector<32x32xf32>, vector<8x32xf32> -> vector<8x32xf32>
    %cst_25 = arith.constant dense<0.000000e+00> : vector<8x32xf32>
    %46 = tpu.matmul %39, %2, %cst_25 {dimension_numbers = #tpu.dot_dimension_numbers<[1], [0], [0], [1], [0, 0, 1, 1], [], []>} : vector<8x32xf32>, vector<32x32xf32>, vector<8x32xf32> -> vector<8x32xf32>
    %47 = vector.broadcast %3 : vector<1x32xf32> to vector<8x32xf32>
    %48 = arith.addf %46, %47 : vector<8x32xf32>
    %49 = arith.index_cast %c1_i32 : i32 to index
    %c0_26 = arith.constant 0 : index
    %c0_27 = arith.constant 0 : index
    %50 = vector.load %arg0[%49, %c0_26, %c0_27] : memref<8x8x32xf32, #tpu.memory_space<vmem>>, vector<1x8x32xf32>
    %51 = vector.shape_cast %50 : vector<1x8x32xf32> to vector<8x32xf32>
    %52 = arith.addf %51, %44 : vector<8x32xf32>
    %53 = arith.negf %52 : vector<8x32xf32>
    %54 = math.exp %53 : vector<8x32xf32>
    %cst_28 = arith.constant 1.000000e+00 : f32
    %55 = vector.broadcast %cst_28 : f32 to vector<8x32xf32>
    %56 = arith.addf %55, %54 : vector<8x32xf32>
    %57 = arith.divf %55, %56 : vector<8x32xf32>
    %58 = arith.index_cast %c1_i32 : i32 to index
    %c0_29 = arith.constant 0 : index
    %c0_30 = arith.constant 0 : index
    %59 = vector.load %arg1[%58, %c0_29, %c0_30] : memref<8x8x32xf32, #tpu.memory_space<vmem>>, vector<1x8x32xf32>
    %60 = vector.shape_cast %59 : vector<1x8x32xf32> to vector<8x32xf32>
    %61 = arith.addf %60, %45 : vector<8x32xf32>
    %62 = arith.negf %61 : vector<8x32xf32>
    %63 = math.exp %62 : vector<8x32xf32>
    %cst_31 = arith.constant 1.000000e+00 : f32
    %64 = vector.broadcast %cst_31 : f32 to vector<8x32xf32>
    %65 = arith.addf %64, %63 : vector<8x32xf32>
    %66 = arith.divf %64, %65 : vector<8x32xf32>
    %67 = arith.index_cast %c1_i32 : i32 to index
    %c0_32 = arith.constant 0 : index
    %c0_33 = arith.constant 0 : index
    %68 = vector.load %arg2[%67, %c0_32, %c0_33] : memref<8x8x32xf32, #tpu.memory_space<vmem>>, vector<1x8x32xf32>
    %69 = vector.shape_cast %68 : vector<1x8x32xf32> to vector<8x32xf32>
    %70 = arith.mulf %57, %48 : vector<8x32xf32>
    %71 = arith.addf %69, %70 : vector<8x32xf32>
    %72 = math.tanh %71 : vector<8x32xf32>
    %cst_34 = arith.constant 1.000000e+00 : f32
    %73 = vector.broadcast %cst_34 : f32 to vector<8x32xf32>
    %74 = arith.subf %73, %66 : vector<8x32xf32>
    %75 = arith.mulf %74, %72 : vector<8x32xf32>
    %76 = arith.mulf %66, %39 : vector<8x32xf32>
    %77 = arith.addf %75, %76 : vector<8x32xf32>
    %78 = arith.index_cast %c1_i32 : i32 to index
    %c0_35 = arith.constant 0 : index
    %c0_36 = arith.constant 0 : index
    %79 = vector.load %arg8[%78, %c0_35, %c0_36] : memref<8x8x32xf32, #tpu.memory_space<vmem>>, vector<1x8x32xf32>
    %80 = vector.shape_cast %79 : vector<1x8x32xf32> to vector<8x32xf32>
    %81 = vector.shape_cast %77 : vector<8x32xf32> to vector<1x8x32xf32>
    tpu.vector_store %arg8[%78, %c0_35, %c0_36], %81 {strides = array<i32>} : memref<8x8x32xf32, #tpu.memory_space<vmem>>, vector<1x8x32xf32>,
    %c2_i32 = arith.constant 2 : i32
    %cst_37 = arith.constant dense<0.000000e+00> : vector<8x32xf32>
    %82 = tpu.matmul %77, %0, %cst_37 {dimension_numbers = #tpu.dot_dimension_numbers<[1], [0], [0], [1], [0, 0, 1, 1], [], []>} : vector<8x32xf32>, vector<32x32xf32>, vector<8x32xf32> -> vector<8x32xf32>
    %cst_38 = arith.constant dense<0.000000e+00> : vector<8x32xf32>
    %83 = tpu.matmul %77, %1, %cst_38 {dimension_numbers = #tpu.dot_dimension_numbers<[1], [0], [0], [1], [0, 0, 1, 1], [], []>} : vector<8x32xf32>, vector<32x32xf32>, vector<8x32xf32> -> vector<8x32xf32>
    %cst_39 = arith.constant dense<0.000000e+00> : vector<8x32xf32>
    %84 = tpu.matmul %77, %2, %cst_39 {dimension_numbers = #tpu.dot_dimension_numbers<[1], [0], [0], [1], [0, 0, 1, 1], [], []>} : vector<8x32xf32>, vector<32x32xf32>, vector<8x32xf32> -> vector<8x32xf32>
    %85 = vector.broadcast %3 : vector<1x32xf32> to vector<8x32xf32>
    %86 = arith.addf %84, %85 : vector<8x32xf32>
    %87 = arith.index_cast %c2_i32 : i32 to index
    %c0_40 = arith.constant 0 : index
    %c0_41 = arith.constant 0 : index
    %88 = vector.load %arg0[%87, %c0_40, %c0_41] : memref<8x8x32xf32, #tpu.memory_space<vmem>>, vector<1x8x32xf32>
    %89 = vector.shape_cast %88 : vector<1x8x32xf32> to vector<8x32xf32>
    %90 = arith.addf %89, %82 : vector<8x32xf32>
    %91 = arith.negf %90 : vector<8x32xf32>
    %92 = math.exp %91 : vector<8x32xf32>
    %cst_42 = arith.constant 1.000000e+00 : f32
    %93 = vector.broadcast %cst_42 : f32 to vector<8x32xf32>
    %94 = arith.addf %93, %92 : vector<8x32xf32>
    %95 = arith.divf %93, %94 : vector<8x32xf32>
    %96 = arith.index_cast %c2_i32 : i32 to index
    %c0_43 = arith.constant 0 : index
    %c0_44 = arith.constant 0 : index
    %97 = vector.load %arg1[%96, %c0_43, %c0_44] : memref<8x8x32xf32, #tpu.memory_space<vmem>>, vector<1x8x32xf32>
    %98 = vector.shape_cast %97 : vector<1x8x32xf32> to vector<8x32xf32>
    %99 = arith.addf %98, %83 : vector<8x32xf32>
    %100 = arith.negf %99 : vector<8x32xf32>
    %101 = math.exp %100 : vector<8x32xf32>
    %cst_45 = arith.constant 1.000000e+00 : f32
    %102 = vector.broadcast %cst_45 : f32 to vector<8x32xf32>
    %103 = arith.addf %102, %101 : vector<8x32xf32>
    %104 = arith.divf %102, %103 : vector<8x32xf32>
    %105 = arith.index_cast %c2_i32 : i32 to index
    %c0_46 = arith.constant 0 : index
    %c0_47 = arith.constant 0 : index
    %106 = vector.load %arg2[%105, %c0_46, %c0_47] : memref<8x8x32xf32, #tpu.memory_space<vmem>>, vector<1x8x32xf32>
    %107 = vector.shape_cast %106 : vector<1x8x32xf32> to vector<8x32xf32>
    %108 = arith.mulf %95, %86 : vector<8x32xf32>
    %109 = arith.addf %107, %108 : vector<8x32xf32>
    %110 = math.tanh %109 : vector<8x32xf32>
    %cst_48 = arith.constant 1.000000e+00 : f32
    %111 = vector.broadcast %cst_48 : f32 to vector<8x32xf32>
    %112 = arith.subf %111, %104 : vector<8x32xf32>
    %113 = arith.mulf %112, %110 : vector<8x32xf32>
    %114 = arith.mulf %104, %77 : vector<8x32xf32>
    %115 = arith.addf %113, %114 : vector<8x32xf32>
    %116 = arith.index_cast %c2_i32 : i32 to index
    %c0_49 = arith.constant 0 : index
    %c0_50 = arith.constant 0 : index
    %117 = vector.load %arg8[%116, %c0_49, %c0_50] : memref<8x8x32xf32, #tpu.memory_space<vmem>>, vector<1x8x32xf32>
    %118 = vector.shape_cast %117 : vector<1x8x32xf32> to vector<8x32xf32>
    %119 = vector.shape_cast %115 : vector<8x32xf32> to vector<1x8x32xf32>
    tpu.vector_store %arg8[%116, %c0_49, %c0_50], %119 {strides = array<i32>} : memref<8x8x32xf32, #tpu.memory_space<vmem>>, vector<1x8x32xf32>,
    %c3_i32 = arith.constant 3 : i32
    %cst_51 = arith.constant dense<0.000000e+00> : vector<8x32xf32>
    %120 = tpu.matmul %115, %0, %cst_51 {dimension_numbers = #tpu.dot_dimension_numbers<[1], [0], [0], [1], [0, 0, 1, 1], [], []>} : vector<8x32xf32>, vector<32x32xf32>, vector<8x32xf32> -> vector<8x32xf32>
    %cst_52 = arith.constant dense<0.000000e+00> : vector<8x32xf32>
    %121 = tpu.matmul %115, %1, %cst_52 {dimension_numbers = #tpu.dot_dimension_numbers<[1], [0], [0], [1], [0, 0, 1, 1], [], []>} : vector<8x32xf32>, vector<32x32xf32>, vector<8x32xf32> -> vector<8x32xf32>
    %cst_53 = arith.constant dense<0.000000e+00> : vector<8x32xf32>
    %122 = tpu.matmul %115, %2, %cst_53 {dimension_numbers = #tpu.dot_dimension_numbers<[1], [0], [0], [1], [0, 0, 1, 1], [], []>} : vector<8x32xf32>, vector<32x32xf32>, vector<8x32xf32> -> vector<8x32xf32>
    %123 = vector.broadcast %3 : vector<1x32xf32> to vector<8x32xf32>
    %124 = arith.addf %122, %123 : vector<8x32xf32>
    %125 = arith.index_cast %c3_i32 : i32 to index
    %c0_54 = arith.constant 0 : index
    %c0_55 = arith.constant 0 : index
    %126 = vector.load %arg0[%125, %c0_54, %c0_55] : memref<8x8x32xf32, #tpu.memory_space<vmem>>, vector<1x8x32xf32>
    %127 = vector.shape_cast %126 : vector<1x8x32xf32> to vector<8x32xf32>
    %128 = arith.addf %127, %120 : vector<8x32xf32>
    %129 = arith.negf %128 : vector<8x32xf32>
    %130 = math.exp %129 : vector<8x32xf32>
    %cst_56 = arith.constant 1.000000e+00 : f32
    %131 = vector.broadcast %cst_56 : f32 to vector<8x32xf32>
    %132 = arith.addf %131, %130 : vector<8x32xf32>
    %133 = arith.divf %131, %132 : vector<8x32xf32>
    %134 = arith.index_cast %c3_i32 : i32 to index
    %c0_57 = arith.constant 0 : index
    %c0_58 = arith.constant 0 : index
    %135 = vector.load %arg1[%134, %c0_57, %c0_58] : memref<8x8x32xf32, #tpu.memory_space<vmem>>, vector<1x8x32xf32>
    %136 = vector.shape_cast %135 : vector<1x8x32xf32> to vector<8x32xf32>
    %137 = arith.addf %136, %121 : vector<8x32xf32>
    %138 = arith.negf %137 : vector<8x32xf32>
    %139 = math.exp %138 : vector<8x32xf32>
    %cst_59 = arith.constant 1.000000e+00 : f32
    %140 = vector.broadcast %cst_59 : f32 to vector<8x32xf32>
    %141 = arith.addf %140, %139 : vector<8x32xf32>
    %142 = arith.divf %140, %141 : vector<8x32xf32>
    %143 = arith.index_cast %c3_i32 : i32 to index
    %c0_60 = arith.constant 0 : index
    %c0_61 = arith.constant 0 : index
    %144 = vector.load %arg2[%143, %c0_60, %c0_61] : memref<8x8x32xf32, #tpu.memory_space<vmem>>, vector<1x8x32xf32>
    %145 = vector.shape_cast %144 : vector<1x8x32xf32> to vector<8x32xf32>
    %146 = arith.mulf %133, %124 : vector<8x32xf32>
    %147 = arith.addf %145, %146 : vector<8x32xf32>
    %148 = math.tanh %147 : vector<8x32xf32>
    %cst_62 = arith.constant 1.000000e+00 : f32
    %149 = vector.broadcast %cst_62 : f32 to vector<8x32xf32>
    %150 = arith.subf %149, %142 : vector<8x32xf32>
    %151 = arith.mulf %150, %148 : vector<8x32xf32>
    %152 = arith.mulf %142, %115 : vector<8x32xf32>
    %153 = arith.addf %151, %152 : vector<8x32xf32>
    %154 = arith.index_cast %c3_i32 : i32 to index
    %c0_63 = arith.constant 0 : index
    %c0_64 = arith.constant 0 : index
    %155 = vector.load %arg8[%154, %c0_63, %c0_64] : memref<8x8x32xf32, #tpu.memory_space<vmem>>, vector<1x8x32xf32>
    %156 = vector.shape_cast %155 : vector<1x8x32xf32> to vector<8x32xf32>
    %157 = vector.shape_cast %153 : vector<8x32xf32> to vector<1x8x32xf32>
    tpu.vector_store %arg8[%154, %c0_63, %c0_64], %157 {strides = array<i32>} : memref<8x8x32xf32, #tpu.memory_space<vmem>>, vector<1x8x32xf32>,
    %c4_i32 = arith.constant 4 : i32
    %cst_65 = arith.constant dense<0.000000e+00> : vector<8x32xf32>
    %158 = tpu.matmul %153, %0, %cst_65 {dimension_numbers = #tpu.dot_dimension_numbers<[1], [0], [0], [1], [0, 0, 1, 1], [], []>} : vector<8x32xf32>, vector<32x32xf32>, vector<8x32xf32> -> vector<8x32xf32>
    %cst_66 = arith.constant dense<0.000000e+00> : vector<8x32xf32>
    %159 = tpu.matmul %153, %1, %cst_66 {dimension_numbers = #tpu.dot_dimension_numbers<[1], [0], [0], [1], [0, 0, 1, 1], [], []>} : vector<8x32xf32>, vector<32x32xf32>, vector<8x32xf32> -> vector<8x32xf32>
    %cst_67 = arith.constant dense<0.000000e+00> : vector<8x32xf32>
    %160 = tpu.matmul %153, %2, %cst_67 {dimension_numbers = #tpu.dot_dimension_numbers<[1], [0], [0], [1], [0, 0, 1, 1], [], []>} : vector<8x32xf32>, vector<32x32xf32>, vector<8x32xf32> -> vector<8x32xf32>
    %161 = vector.broadcast %3 : vector<1x32xf32> to vector<8x32xf32>
    %162 = arith.addf %160, %161 : vector<8x32xf32>
    %163 = arith.index_cast %c4_i32 : i32 to index
    %c0_68 = arith.constant 0 : index
    %c0_69 = arith.constant 0 : index
    %164 = vector.load %arg0[%163, %c0_68, %c0_69] : memref<8x8x32xf32, #tpu.memory_space<vmem>>, vector<1x8x32xf32>
    %165 = vector.shape_cast %164 : vector<1x8x32xf32> to vector<8x32xf32>
    %166 = arith.addf %165, %158 : vector<8x32xf32>
    %167 = arith.negf %166 : vector<8x32xf32>
    %168 = math.exp %167 : vector<8x32xf32>
    %cst_70 = arith.constant 1.000000e+00 : f32
    %169 = vector.broadcast %cst_70 : f32 to vector<8x32xf32>
    %170 = arith.addf %169, %168 : vector<8x32xf32>
    %171 = arith.divf %169, %170 : vector<8x32xf32>
    %172 = arith.index_cast %c4_i32 : i32 to index
    %c0_71 = arith.constant 0 : index
    %c0_72 = arith.constant 0 : index
    %173 = vector.load %arg1[%172, %c0_71, %c0_72] : memref<8x8x32xf32, #tpu.memory_space<vmem>>, vector<1x8x32xf32>
    %174 = vector.shape_cast %173 : vector<1x8x32xf32> to vector<8x32xf32>
    %175 = arith.addf %174, %159 : vector<8x32xf32>
    %176 = arith.negf %175 : vector<8x32xf32>
    %177 = math.exp %176 : vector<8x32xf32>
    %cst_73 = arith.constant 1.000000e+00 : f32
    %178 = vector.broadcast %cst_73 : f32 to vector<8x32xf32>
    %179 = arith.addf %178, %177 : vector<8x32xf32>
    %180 = arith.divf %178, %179 : vector<8x32xf32>
    %181 = arith.index_cast %c4_i32 : i32 to index
    %c0_74 = arith.constant 0 : index
    %c0_75 = arith.constant 0 : index
    %182 = vector.load %arg2[%181, %c0_74, %c0_75] : memref<8x8x32xf32, #tpu.memory_space<vmem>>, vector<1x8x32xf32>
    %183 = vector.shape_cast %182 : vector<1x8x32xf32> to vector<8x32xf32>
    %184 = arith.mulf %171, %162 : vector<8x32xf32>
    %185 = arith.addf %183, %184 : vector<8x32xf32>
    %186 = math.tanh %185 : vector<8x32xf32>
    %cst_76 = arith.constant 1.000000e+00 : f32
    %187 = vector.broadcast %cst_76 : f32 to vector<8x32xf32>
    %188 = arith.subf %187, %180 : vector<8x32xf32>
    %189 = arith.mulf %188, %186 : vector<8x32xf32>
    %190 = arith.mulf %180, %153 : vector<8x32xf32>
    %191 = arith.addf %189, %190 : vector<8x32xf32>
    %192 = arith.index_cast %c4_i32 : i32 to index
    %c0_77 = arith.constant 0 : index
    %c0_78 = arith.constant 0 : index
    %193 = vector.load %arg8[%192, %c0_77, %c0_78] : memref<8x8x32xf32, #tpu.memory_space<vmem>>, vector<1x8x32xf32>
    %194 = vector.shape_cast %193 : vector<1x8x32xf32> to vector<8x32xf32>
    %195 = vector.shape_cast %191 : vector<8x32xf32> to vector<1x8x32xf32>
    tpu.vector_store %arg8[%192, %c0_77, %c0_78], %195 {strides = array<i32>} : memref<8x8x32xf32, #tpu.memory_space<vmem>>, vector<1x8x32xf32>,
    %c5_i32 = arith.constant 5 : i32
    %cst_79 = arith.constant dense<0.000000e+00> : vector<8x32xf32>
    %196 = tpu.matmul %191, %0, %cst_79 {dimension_numbers = #tpu.dot_dimension_numbers<[1], [0], [0], [1], [0, 0, 1, 1], [], []>} : vector<8x32xf32>, vector<32x32xf32>, vector<8x32xf32> -> vector<8x32xf32>
    %cst_80 = arith.constant dense<0.000000e+00> : vector<8x32xf32>
    %197 = tpu.matmul %191, %1, %cst_80 {dimension_numbers = #tpu.dot_dimension_numbers<[1], [0], [0], [1], [0, 0, 1, 1], [], []>} : vector<8x32xf32>, vector<32x32xf32>, vector<8x32xf32> -> vector<8x32xf32>
    %cst_81 = arith.constant dense<0.000000e+00> : vector<8x32xf32>
    %198 = tpu.matmul %191, %2, %cst_81 {dimension_numbers = #tpu.dot_dimension_numbers<[1], [0], [0], [1], [0, 0, 1, 1], [], []>} : vector<8x32xf32>, vector<32x32xf32>, vector<8x32xf32> -> vector<8x32xf32>
    %199 = vector.broadcast %3 : vector<1x32xf32> to vector<8x32xf32>
    %200 = arith.addf %198, %199 : vector<8x32xf32>
    %201 = arith.index_cast %c5_i32 : i32 to index
    %c0_82 = arith.constant 0 : index
    %c0_83 = arith.constant 0 : index
    %202 = vector.load %arg0[%201, %c0_82, %c0_83] : memref<8x8x32xf32, #tpu.memory_space<vmem>>, vector<1x8x32xf32>
    %203 = vector.shape_cast %202 : vector<1x8x32xf32> to vector<8x32xf32>
    %204 = arith.addf %203, %196 : vector<8x32xf32>
    %205 = arith.negf %204 : vector<8x32xf32>
    %206 = math.exp %205 : vector<8x32xf32>
    %cst_84 = arith.constant 1.000000e+00 : f32
    %207 = vector.broadcast %cst_84 : f32 to vector<8x32xf32>
    %208 = arith.addf %207, %206 : vector<8x32xf32>
    %209 = arith.divf %207, %208 : vector<8x32xf32>
    %210 = arith.index_cast %c5_i32 : i32 to index
    %c0_85 = arith.constant 0 : index
    %c0_86 = arith.constant 0 : index
    %211 = vector.load %arg1[%210, %c0_85, %c0_86] : memref<8x8x32xf32, #tpu.memory_space<vmem>>, vector<1x8x32xf32>
    %212 = vector.shape_cast %211 : vector<1x8x32xf32> to vector<8x32xf32>
    %213 = arith.addf %212, %197 : vector<8x32xf32>
    %214 = arith.negf %213 : vector<8x32xf32>
    %215 = math.exp %214 : vector<8x32xf32>
    %cst_87 = arith.constant 1.000000e+00 : f32
    %216 = vector.broadcast %cst_87 : f32 to vector<8x32xf32>
    %217 = arith.addf %216, %215 : vector<8x32xf32>
    %218 = arith.divf %216, %217 : vector<8x32xf32>
    %219 = arith.index_cast %c5_i32 : i32 to index
    %c0_88 = arith.constant 0 : index
    %c0_89 = arith.constant 0 : index
    %220 = vector.load %arg2[%219, %c0_88, %c0_89] : memref<8x8x32xf32, #tpu.memory_space<vmem>>, vector<1x8x32xf32>
    %221 = vector.shape_cast %220 : vector<1x8x32xf32> to vector<8x32xf32>
    %222 = arith.mulf %209, %200 : vector<8x32xf32>
    %223 = arith.addf %221, %222 : vector<8x32xf32>
    %224 = math.tanh %223 : vector<8x32xf32>
    %cst_90 = arith.constant 1.000000e+00 : f32
    %225 = vector.broadcast %cst_90 : f32 to vector<8x32xf32>
    %226 = arith.subf %225, %218 : vector<8x32xf32>
    %227 = arith.mulf %226, %224 : vector<8x32xf32>
    %228 = arith.mulf %218, %191 : vector<8x32xf32>
    %229 = arith.addf %227, %228 : vector<8x32xf32>
    %230 = arith.index_cast %c5_i32 : i32 to index
    %c0_91 = arith.constant 0 : index
    %c0_92 = arith.constant 0 : index
    %231 = vector.load %arg8[%230, %c0_91, %c0_92] : memref<8x8x32xf32, #tpu.memory_space<vmem>>, vector<1x8x32xf32>
    %232 = vector.shape_cast %231 : vector<1x8x32xf32> to vector<8x32xf32>
    %233 = vector.shape_cast %229 : vector<8x32xf32> to vector<1x8x32xf32>
    tpu.vector_store %arg8[%230, %c0_91, %c0_92], %233 {strides = array<i32>} : memref<8x8x32xf32, #tpu.memory_space<vmem>>, vector<1x8x32xf32>,
    %c6_i32 = arith.constant 6 : i32
    %cst_93 = arith.constant dense<0.000000e+00> : vector<8x32xf32>
    %234 = tpu.matmul %229, %0, %cst_93 {dimension_numbers = #tpu.dot_dimension_numbers<[1], [0], [0], [1], [0, 0, 1, 1], [], []>} : vector<8x32xf32>, vector<32x32xf32>, vector<8x32xf32> -> vector<8x32xf32>
    %cst_94 = arith.constant dense<0.000000e+00> : vector<8x32xf32>
    %235 = tpu.matmul %229, %1, %cst_94 {dimension_numbers = #tpu.dot_dimension_numbers<[1], [0], [0], [1], [0, 0, 1, 1], [], []>} : vector<8x32xf32>, vector<32x32xf32>, vector<8x32xf32> -> vector<8x32xf32>
    %cst_95 = arith.constant dense<0.000000e+00> : vector<8x32xf32>
    %236 = tpu.matmul %229, %2, %cst_95 {dimension_numbers = #tpu.dot_dimension_numbers<[1], [0], [0], [1], [0, 0, 1, 1], [], []>} : vector<8x32xf32>, vector<32x32xf32>, vector<8x32xf32> -> vector<8x32xf32>
    %237 = vector.broadcast %3 : vector<1x32xf32> to vector<8x32xf32>
    %238 = arith.addf %236, %237 : vector<8x32xf32>
    %239 = arith.index_cast %c6_i32 : i32 to index
    %c0_96 = arith.constant 0 : index
    %c0_97 = arith.constant 0 : index
    %240 = vector.load %arg0[%239, %c0_96, %c0_97] : memref<8x8x32xf32, #tpu.memory_space<vmem>>, vector<1x8x32xf32>
    %241 = vector.shape_cast %240 : vector<1x8x32xf32> to vector<8x32xf32>
    %242 = arith.addf %241, %234 : vector<8x32xf32>
    %243 = arith.negf %242 : vector<8x32xf32>
    %244 = math.exp %243 : vector<8x32xf32>
    %cst_98 = arith.constant 1.000000e+00 : f32
    %245 = vector.broadcast %cst_98 : f32 to vector<8x32xf32>
    %246 = arith.addf %245, %244 : vector<8x32xf32>
    %247 = arith.divf %245, %246 : vector<8x32xf32>
    %248 = arith.index_cast %c6_i32 : i32 to index
    %c0_99 = arith.constant 0 : index
    %c0_100 = arith.constant 0 : index
    %249 = vector.load %arg1[%248, %c0_99, %c0_100] : memref<8x8x32xf32, #tpu.memory_space<vmem>>, vector<1x8x32xf32>
    %250 = vector.shape_cast %249 : vector<1x8x32xf32> to vector<8x32xf32>
    %251 = arith.addf %250, %235 : vector<8x32xf32>
    %252 = arith.negf %251 : vector<8x32xf32>
    %253 = math.exp %252 : vector<8x32xf32>
    %cst_101 = arith.constant 1.000000e+00 : f32
    %254 = vector.broadcast %cst_101 : f32 to vector<8x32xf32>
    %255 = arith.addf %254, %253 : vector<8x32xf32>
    %256 = arith.divf %254, %255 : vector<8x32xf32>
    %257 = arith.index_cast %c6_i32 : i32 to index
    %c0_102 = arith.constant 0 : index
    %c0_103 = arith.constant 0 : index
    %258 = vector.load %arg2[%257, %c0_102, %c0_103] : memref<8x8x32xf32, #tpu.memory_space<vmem>>, vector<1x8x32xf32>
    %259 = vector.shape_cast %258 : vector<1x8x32xf32> to vector<8x32xf32>
    %260 = arith.mulf %247, %238 : vector<8x32xf32>
    %261 = arith.addf %259, %260 : vector<8x32xf32>
    %262 = math.tanh %261 : vector<8x32xf32>
    %cst_104 = arith.constant 1.000000e+00 : f32
    %263 = vector.broadcast %cst_104 : f32 to vector<8x32xf32>
    %264 = arith.subf %263, %256 : vector<8x32xf32>
    %265 = arith.mulf %264, %262 : vector<8x32xf32>
    %266 = arith.mulf %256, %229 : vector<8x32xf32>
    %267 = arith.addf %265, %266 : vector<8x32xf32>
    %268 = arith.index_cast %c6_i32 : i32 to index
    %c0_105 = arith.constant 0 : index
    %c0_106 = arith.constant 0 : index
    %269 = vector.load %arg8[%268, %c0_105, %c0_106] : memref<8x8x32xf32, #tpu.memory_space<vmem>>, vector<1x8x32xf32>
    %270 = vector.shape_cast %269 : vector<1x8x32xf32> to vector<8x32xf32>
    %271 = vector.shape_cast %267 : vector<8x32xf32> to vector<1x8x32xf32>
    tpu.vector_store %arg8[%268, %c0_105, %c0_106], %271 {strides = array<i32>} : memref<8x8x32xf32, #tpu.memory_space<vmem>>, vector<1x8x32xf32>,
    %c7_i32 = arith.constant 7 : i32
    %cst_107 = arith.constant dense<0.000000e+00> : vector<8x32xf32>
    %272 = tpu.matmul %267, %0, %cst_107 {dimension_numbers = #tpu.dot_dimension_numbers<[1], [0], [0], [1], [0, 0, 1, 1], [], []>} : vector<8x32xf32>, vector<32x32xf32>, vector<8x32xf32> -> vector<8x32xf32>
    %cst_108 = arith.constant dense<0.000000e+00> : vector<8x32xf32>
    %273 = tpu.matmul %267, %1, %cst_108 {dimension_numbers = #tpu.dot_dimension_numbers<[1], [0], [0], [1], [0, 0, 1, 1], [], []>} : vector<8x32xf32>, vector<32x32xf32>, vector<8x32xf32> -> vector<8x32xf32>
    %cst_109 = arith.constant dense<0.000000e+00> : vector<8x32xf32>
    %274 = tpu.matmul %267, %2, %cst_109 {dimension_numbers = #tpu.dot_dimension_numbers<[1], [0], [0], [1], [0, 0, 1, 1], [], []>} : vector<8x32xf32>, vector<32x32xf32>, vector<8x32xf32> -> vector<8x32xf32>
    %275 = vector.broadcast %3 : vector<1x32xf32> to vector<8x32xf32>
    %276 = arith.addf %274, %275 : vector<8x32xf32>
    %277 = arith.index_cast %c7_i32 : i32 to index
    %c0_110 = arith.constant 0 : index
    %c0_111 = arith.constant 0 : index
    %278 = vector.load %arg0[%277, %c0_110, %c0_111] : memref<8x8x32xf32, #tpu.memory_space<vmem>>, vector<1x8x32xf32>
    %279 = vector.shape_cast %278 : vector<1x8x32xf32> to vector<8x32xf32>
    %280 = arith.addf %279, %272 : vector<8x32xf32>
    %281 = arith.negf %280 : vector<8x32xf32>
    %282 = math.exp %281 : vector<8x32xf32>
    %cst_112 = arith.constant 1.000000e+00 : f32
    %283 = vector.broadcast %cst_112 : f32 to vector<8x32xf32>
    %284 = arith.addf %283, %282 : vector<8x32xf32>
    %285 = arith.divf %283, %284 : vector<8x32xf32>
    %286 = arith.index_cast %c7_i32 : i32 to index
    %c0_113 = arith.constant 0 : index
    %c0_114 = arith.constant 0 : index
    %287 = vector.load %arg1[%286, %c0_113, %c0_114] : memref<8x8x32xf32, #tpu.memory_space<vmem>>, vector<1x8x32xf32>
    %288 = vector.shape_cast %287 : vector<1x8x32xf32> to vector<8x32xf32>
    %289 = arith.addf %288, %273 : vector<8x32xf32>
    %290 = arith.negf %289 : vector<8x32xf32>
    %291 = math.exp %290 : vector<8x32xf32>
    %cst_115 = arith.constant 1.000000e+00 : f32
    %292 = vector.broadcast %cst_115 : f32 to vector<8x32xf32>
    %293 = arith.addf %292, %291 : vector<8x32xf32>
    %294 = arith.divf %292, %293 : vector<8x32xf32>
    %295 = arith.index_cast %c7_i32 : i32 to index
    %c0_116 = arith.constant 0 : index
    %c0_117 = arith.constant 0 : index
    %296 = vector.load %arg2[%295, %c0_116, %c0_117] : memref<8x8x32xf32, #tpu.memory_space<vmem>>, vector<1x8x32xf32>
    %297 = vector.shape_cast %296 : vector<1x8x32xf32> to vector<8x32xf32>
    %298 = arith.mulf %285, %276 : vector<8x32xf32>
    %299 = arith.addf %297, %298 : vector<8x32xf32>
    %300 = math.tanh %299 : vector<8x32xf32>
    %cst_118 = arith.constant 1.000000e+00 : f32
    %301 = vector.broadcast %cst_118 : f32 to vector<8x32xf32>
    %302 = arith.subf %301, %294 : vector<8x32xf32>
    %303 = arith.mulf %302, %300 : vector<8x32xf32>
    %304 = arith.mulf %294, %267 : vector<8x32xf32>
    %305 = arith.addf %303, %304 : vector<8x32xf32>
    %306 = arith.index_cast %c7_i32 : i32 to index
    %c0_119 = arith.constant 0 : index
    %c0_120 = arith.constant 0 : index
    %307 = vector.load %arg8[%306, %c0_119, %c0_120] : memref<8x8x32xf32, #tpu.memory_space<vmem>>, vector<1x8x32xf32>
    %308 = vector.shape_cast %307 : vector<1x8x32xf32> to vector<8x32xf32>
    %309 = vector.shape_cast %305 : vector<8x32xf32> to vector<1x8x32xf32>
    tpu.vector_store %arg8[%306, %c0_119, %c0_120], %309 {strides = array<i32>} : memref<8x8x32xf32, #tpu.memory_space<vmem>>, vector<1x8x32xf32>,
    %c8_i32 = arith.constant 8 : i32
    %c0_121 = arith.constant 0 : index
    %c0_122 = arith.constant 0 : index
    %c0_123 = arith.constant 0 : index
    %310 = vector.load %arg9[%c0_121, %c0_122, %c0_123] : memref<1x8x32xf32, #tpu.memory_space<vmem>>, vector<1x8x32xf32>
    %311 = vector.shape_cast %310 : vector<1x8x32xf32> to vector<8x32xf32>
    %312 = vector.shape_cast %305 : vector<8x32xf32> to vector<1x8x32xf32>
    tpu.vector_store %arg9[%c0_121, %c0_122, %c0_123], %312 {strides = array<i32>} : memref<1x8x32xf32, #tpu.memory_space<vmem>>, vector<1x8x32xf32>,
    return
  }
}

</mosaic_0001>

<llo_original>
// kernel: encoder_rnn_forward.2
$region0: #{encoder_rnn_forward.2}
  #allocation0 [shape = 'u32[]', space=smem, size = 0x4, offset = 0x4, fixed_abs, tag = 'smem constant byte address 0x4 - core index']
  #allocation1 [shape = 'u32[144,128]{1,0:T(1,128)}', space=vmem, size = 0x12000, scoped, tag = 'internal scratch']
  %s0 = inlined_call_operand.hbm [shape: f32[64,16], index: 0, kind: input, shape index: {}]
  %s1 = inlined_call_operand.vmem [shape: f32[16,96], index: 1, kind: input, shape index: {}]
  %s2 = inlined_call_operand.vmem [shape: f32[1,96], index: 2, kind: input, shape index: {}]
  %s3 = inlined_call_operand.vmem [shape: f32[64,96], index: 3, kind: output, shape index: {}]
  %s4 = sld [smem:[#allocation0]]
  $region26: #{encoder_rnn_forward.2} parent=0
    _
  %s6 = ssub.s32 1, %s4
  %s7 = scalar_select 0, %s6, %s4
  $region1: #{encoder_rnn_forward.2} parent=0
    #allocation2 [shape = 'u8[32768]{0}', space=vmem, size = 0x8000, scoped, tag = 'input window, operand 0, single buffered']
    #allocation3 [shape = 's32[1]{0}', space=sflag, size = 0x4, scoped, tag = 'scoped memory for encoder_rnn_forward.2']
    %8 = vsyncpa [#allocation3], 0
    // Predicated region
    $region2: #{encoder_rnn_forward.2} parent=1 // pred_check
      _
    $region3: #{encoder_rnn_forward.2} parent=1 // pred_check_branch
      %10 = sbr.rel (0) target = $region5
    $region4: #{encoder_rnn_forward.2} parent=1 // pred_region
      %s12 = ssub.s32 1024, 1024
      %13 = vsyncadd [#allocation3], %s12
      %s14 = sshll.u32 [#allocation2], 4
      %s15 = int_to_ptr.vmem [resolvable:$true] %s14
      %20 = dma.hbm_to_vmem [thread:$0]  %s0, 1024, %s15, [#allocation3], 128, 128, 8
    $region5: #{encoder_rnn_forward.2} parent=1 // pred_fallthru
      _
    // Predicated region
    $region6: #{encoder_rnn_forward.2} parent=1 // pred_check
      _
    $region7: #{encoder_rnn_forward.2} parent=1 // pred_check_branch
      %22 = sbr.rel (0) target = $region9
    $region8: #{encoder_rnn_forward.2} parent=1 // pred_region
      _
    $region9: #{encoder_rnn_forward.2} parent=1 // pred_fallthru
      _
    // Predicated region
    $region10: #{encoder_rnn_forward.2} parent=1 // pred_check
      _
    $region11: #{encoder_rnn_forward.2} parent=1 // pred_check_branch
      %24 = sbr.rel (0) target = $region13
    $region12: #{encoder_rnn_forward.2} parent=1 // pred_region
      _
    $region13: #{encoder_rnn_forward.2} parent=1 // pred_fallthru
      _
    // Predicated region
    $region14: #{encoder_rnn_forward.2} parent=1 // pred_check
      _
    $region15: #{encoder_rnn_forward.2} parent=1 // pred_check_branch
      %26 = sbr.rel (0) target = $region17
    $region16: #{encoder_rnn_forward.2} parent=1 // pred_region
      %27 = dma.done [#allocation3], 1024
    $region17: #{encoder_rnn_forward.2} parent=1 // pred_fallthru
      _
    %v28 = vld [vmem:[#allocation2] sm:$0xff]
    %v29 = vld [vmem:[#allocation2 + $0x8] sm:$0xff]
    %v30 = vld [vmem:[#allocation2 + $0x10] sm:$0xff]
    %v31 = vld [vmem:[#allocation2 + $0x18] sm:$0xff]
    %v32 = vld [vmem:[#allocation2 + $0x20] sm:$0xff]
    %v33 = vld [vmem:[#allocation2 + $0x28] sm:$0xff]
    %v34 = vld [vmem:[#allocation2 + $0x30] sm:$0xff]
    %v35 = vld [vmem:[#allocation2 + $0x38] sm:$0xff]
    %v36 = vld [vmem:[%s1] sm:$0xff]
    %v37 = vld [vmem:[%s1 + $0x8] sm:$0xff]
    %v38 = vld [vmem:[%s2] sm:$0x1]
    %v40 = vlaneseq
    %v41 = vshrl.u32 %v40, 7
    %v42 = vsub.s32 0, %v41
    %v43 = vrot.slane %v38, %v42
    %vm45 = vcmask 130048
    %v47 = vsel %vm45, %v28, 0
    %v50 = vsel %vm45, %v29, 0
    %v53 = vsel %vm45, %v30, 0
    %v56 = vsel %vm45, %v31, 0
    %v59 = vsel %vm45, %v32, 0
    %v62 = vsel %vm45, %v33, 0
    %v65 = vsel %vm45, %v34, 0
    %v68 = vsel %vm45, %v35, 0
    %70 = vmatprep.subr.mxu0 0.0
    %71 = vmatpush1.msra.mxu0 %v36
    %72 = vmatprep.subr.mxu0 0.0
    %73 = vmatpush1.msra.mxu0 %v37
    %74 = vmatprep.subr.mxu0 0.0
    %75 = vmatpush1.msra.mxu0 0.0
    %76 = vmatprep.subr.mxu0 0.0
    %77 = vmatpush1.msra.mxu0 0.0
    %78 = vmatprep.subr.mxu0 0.0
    %79 = vmatpush1.msra.mxu0 0.0
    %80 = vmatprep.subr.mxu0 0.0
    %81 = vmatpush1.msra.mxu0 0.0
    %82 = vmatprep.subr.mxu0 0.0
    %83 = vmatpush1.msra.mxu0 0.0
    %84 = vmatprep.subr.mxu0 0.0
    %85 = vmatpush1.msra.mxu0 0.0
    %86 = vmatprep.subr.mxu0 0.0
    %87 = vmatpush1.msra.mxu0 0.0
    %88 = vmatprep.subr.mxu0 0.0
    %89 = vmatpush1.msra.mxu0 0.0
    %90 = vmatprep.subr.mxu0 0.0
    %91 = vmatpush1.msra.mxu0 0.0
    %92 = vmatprep.subr.mxu0 0.0
    %93 = vmatpush1.msra.mxu0 0.0
    %94 = vmatprep.subr.mxu0 0.0
    %95 = vmatpush1.msra.mxu0 0.0
    %96 = vmatprep.subr.mxu0 0.0
    %97 = vmatpush1.msra.mxu0 0.0
    %98 = vmatprep.subr.mxu0 0.0
    %99 = vmatpush1.msra.mxu0 0.0
    %100 = vmatprep.subr.mxu0 0.0
    %101 = vmatpush1.msra.mxu0 0.0
    %102 = vmatprep.subr.mxu0 0.0
    %103 = vmatpush1.msra.mxu0 0.0
    %104 = vmatprep.subr.mxu0 0.0
    %105 = vmatpush1.msra.mxu0 0.0
    %106 = vmatprep.subr.mxu0 0.0
    %107 = vmatpush1.msra.mxu0 0.0
    %108 = vmatprep.subr.mxu0 0.0
    %109 = vmatpush1.msra.mxu0 0.0
    %110 = vmatprep.subr.mxu0 0.0
    %111 = vmatpush1.msra.mxu0 0.0
    %112 = vmatprep.subr.mxu0 0.0
    %113 = vmatpush1.msra.mxu0 0.0
    %114 = vmatprep.subr.mxu0 0.0
    %115 = vmatpush1.msra.mxu0 0.0
    %116 = vmatprep.subr.mxu0 0.0
    %117 = vmatpush1.msra.mxu0 0.0
    %118 = vmatprep.subr.mxu0 0.0
    %119 = vmatpush1.msra.mxu0 0.0
    %120 = vmatprep.subr.mxu0 0.0
    %121 = vmatpush1.msra.mxu0 0.0
    %122 = vmatprep.subr.mxu0 0.0
    %123 = vmatpush1.msra.mxu0 0.0
    %124 = vmatprep.subr.mxu0 0.0
    %125 = vmatpush1.msra.mxu0 0.0
    %126 = vmatprep.subr.mxu0 0.0
    %127 = vmatpush1.msra.mxu0 0.0
    %128 = vmatprep.subr.mxu0 0.0
    %129 = vmatpush1.msra.mxu0 0.0
    %130 = vmatprep.subr.mxu0 0.0
    %131 = vmatpush1.msra.mxu0 0.0
    %132 = vmatprep.subr.mxu0 0.0
    %133 = vmatpush1.msra.mxu0 0.0
    %134 = vmatprep.mubr.f32.mxu0 0.0
    %135 = vmatmul.mubr.f32.gmra.mrb[0].mxu0 %v47
    %v136 = vpop.f32.mrb[0].mxu0
    %v137 = vadd.f32 %v43, %v136
    %v138 = vpop.f32.mrb[0].mxu0
    %139 = vmatprep.mubr.f32.mxu0 0.0
    %140 = vmatmul.mubr.f32.gmra.mrb[0].mxu0 %v50
    %v141 = vpop.f32.mrb[0].mxu0
    %v142 = vadd.f32 %v43, %v141
    %v143 = vpop.f32.mrb[0].mxu0
    %144 = vmatprep.mubr.f32.mxu0 0.0
    %145 = vmatmul.mubr.f32.gmra.mrb[0].mxu0 %v53
    %v146 = vpop.f32.mrb[0].mxu0
    %v147 = vadd.f32 %v43, %v146
    %v148 = vpop.f32.mrb[0].mxu0
    %149 = vmatprep.mubr.f32.mxu0 0.0
    %150 = vmatmul.mubr.f32.gmra.mrb[0].mxu0 %v56
    %v151 = vpop.f32.mrb[0].mxu0
    %v152 = vadd.f32 %v43, %v151
    %v153 = vpop.f32.mrb[0].mxu0
    %154 = vmatprep.mubr.f32.mxu0 0.0
    %155 = vmatmul.mubr.f32.gmra.mrb[0].mxu0 %v59
    %v156 = vpop.f32.mrb[0].mxu0
    %v157 = vadd.f32 %v43, %v156
    %v158 = vpop.f32.mrb[0].mxu0
    %159 = vmatprep.mubr.f32.mxu0 0.0
    %160 = vmatmul.mubr.f32.gmra.mrb[0].mxu0 %v62
    %v161 = vpop.f32.mrb[0].mxu0
    %v162 = vadd.f32 %v43, %v161
    %v163 = vpop.f32.mrb[0].mxu0
    %164 = vmatprep.mubr.f32.mxu0 0.0
    %165 = vmatmul.mubr.f32.gmra.mrb[0].mxu0 %v65
    %v166 = vpop.f32.mrb[0].mxu0
    %v167 = vadd.f32 %v43, %v166
    %v168 = vpop.f32.mrb[0].mxu0
    %169 = vmatprep.mubr.f32.mxu0 0.0
    %170 = vmatmul.mubr.f32.gmra.mrb[0].mxu0 %v68
    %v171 = vpop.f32.mrb[0].mxu0
    %v172 = vadd.f32 %v43, %v171
    %v173 = vpop.f32.mrb[0].mxu0
    %174 = vdwg.mxu0
    %vm175 = vcmask 785408
    %176 = vst.msk [vmem:[%s3] sm:$0xff] %vm175, %v137
    %177 = vst.msk [vmem:[%s3 + $0x8] sm:$0xff] %vm175, %v142
    %178 = vst.msk [vmem:[%s3 + $0x10] sm:$0xff] %vm175, %v147
    %179 = vst.msk [vmem:[%s3 + $0x18] sm:$0xff] %vm175, %v152
    %180 = vst.msk [vmem:[%s3 + $0x20] sm:$0xff] %vm175, %v157
    %181 = vst.msk [vmem:[%s3 + $0x28] sm:$0xff] %vm175, %v162
    %182 = vst.msk [vmem:[%s3 + $0x30] sm:$0xff] %vm175, %v167
    %183 = vst.msk [vmem:[%s3 + $0x38] sm:$0xff] %vm175, %v172
    // Predicated region
    $region18: #{encoder_rnn_forward.2} parent=1 // pred_check
      _
    $region19: #{encoder_rnn_forward.2} parent=1 // pred_check_branch
      %185 = sbr.rel (0) target = $region21
    $region20: #{encoder_rnn_forward.2} parent=1 // pred_region
      _
    $region21: #{encoder_rnn_forward.2} parent=1 // pred_fallthru
      _
    // Predicated region
    $region22: #{encoder_rnn_forward.2} parent=1 // pred_check
      _
    $region23: #{encoder_rnn_forward.2} parent=1 // pred_check_branch
      %187 = sbr.rel (0) target = $region25
    $region24: #{encoder_rnn_forward.2} parent=1 // pred_region
      _
    $region25: #{encoder_rnn_forward.2} parent=1 // pred_fallthru
      _
    %188 = vsyncpa [#allocation3], 1

// kernel: encoder_rnn_forward.3
$region0: #{encoder_rnn_forward.3}
  #allocation0 [shape = 'u32[]', space=smem, size = 0x4, offset = 0x4, fixed_abs, tag = 'smem constant byte address 0x4 - core index']
  #allocation1 [shape = 'u32[144,128]{1,0:T(1,128)}', space=vmem, size = 0x12000, scoped, tag = 'internal scratch']
  %s0 = inlined_call_operand.vmem [shape: f32[8,8,32], index: 0, kind: input, shape index: {}]
  %s1 = inlined_call_operand.vmem [shape: f32[8,8,32], index: 1, kind: input, shape index: {}]
  %s2 = inlined_call_operand.vmem [shape: f32[8,8,32], index: 2, kind: input, shape index: {}]
  %s3 = inlined_call_operand.vmem [shape: f32[1,8,32], index: 3, kind: input, shape index: {}]
  %s4 = inlined_call_operand.vmem [shape: f32[32,32], index: 4, kind: input, shape index: {}]
  %s5 = inlined_call_operand.vmem [shape: f32[32,32], index: 5, kind: input, shape index: {}]
  %s6 = inlined_call_operand.vmem [shape: f32[32,32], index: 6, kind: input, shape index: {}]
  %s7 = inlined_call_operand.vmem [shape: f32[1,32], index: 7, kind: input, shape index: {}]
  %s8 = inlined_call_operand.hbm [shape: f32[8,8,32], index: 8, kind: output, shape index: {0}]
  %s9 = inlined_call_operand.hbm [shape: f32[1,8,32], index: 9, kind: output, shape index: {1}]
  %10 = xla_tuple %s8, %s9
  %s11 = sld [smem:[#allocation0]]
  $region50: #{encoder_rnn_forward.3} parent=0
    _
  %s13 = ssub.s32 1, %s11
  %s14 = scalar_select 0, %s13, %s11
  $region1: #{encoder_rnn_forward.3} parent=0
    #allocation2 [shape = 'u8[32768]{0}', space=vmem, size = 0x8000, scoped, tag = 'output window, operand 0, single buffered']
    #allocation3 [shape = 's32[1]{0}', space=sflag, size = 0x4, scoped, tag = 'scoped memory for encoder_rnn_forward.3']
    #allocation4 [shape = 'u8[4096]{0}', space=vmem, size = 0x1000, scoped, tag = 'output window, operand 1, single buffered']
    #allocation5 [shape = 's32[1]{0}', space=sflag, size = 0x4, scoped, tag = 'scoped memory for encoder_rnn_forward.3']
    %15 = vsyncpa [#allocation3], 0
    %16 = vsyncpa [#allocation5], 0
    // Predicated region
    $region2: #{encoder_rnn_forward.3} parent=1 // pred_check
      _
    $region3: #{encoder_rnn_forward.3} parent=1 // pred_check_branch
      %18 = sbr.rel (0) target = $region5
    $region4: #{encoder_rnn_forward.3} parent=1 // pred_region
      _
    $region5: #{encoder_rnn_forward.3} parent=1 // pred_fallthru
      _
    // Predicated region
    $region6: #{encoder_rnn_forward.3} parent=1 // pred_check
      _
    $region7: #{encoder_rnn_forward.3} parent=1 // pred_check_branch
      %20 = sbr.rel (0) target = $region9
    $region8: #{encoder_rnn_forward.3} parent=1 // pred_region
      _
    $region9: #{encoder_rnn_forward.3} parent=1 // pred_fallthru
      _
    // Predicated region
    $region10: #{encoder_rnn_forward.3} parent=1 // pred_check
      _
    $region11: #{encoder_rnn_forward.3} parent=1 // pred_check_branch
      %22 = sbr.rel (0) target = $region13
    $region12: #{encoder_rnn_forward.3} parent=1 // pred_region
      _
    $region13: #{encoder_rnn_forward.3} parent=1 // pred_fallthru
      _
    // Predicated region
    $region14: #{encoder_rnn_forward.3} parent=1 // pred_check
      _
    $region15: #{encoder_rnn_forward.3} parent=1 // pred_check_branch
      %24 = sbr.rel (0) target = $region17
    $region16: #{encoder_rnn_forward.3} parent=1 // pred_region
      _
    $region17: #{encoder_rnn_forward.3} parent=1 // pred_fallthru
      _
    // Predicated region
    $region18: #{encoder_rnn_forward.3} parent=1 // pred_check
      _
    $region19: #{encoder_rnn_forward.3} parent=1 // pred_check_branch
      %26 = sbr.rel (0) target = $region21
    $region20: #{encoder_rnn_forward.3} parent=1 // pred_region
      _
    $region21: #{encoder_rnn_forward.3} parent=1 // pred_fallthru
      _
    // Predicated region
    $region22: #{encoder_rnn_forward.3} parent=1 // pred_check
      _
    $region23: #{encoder_rnn_forward.3} parent=1 // pred_check_branch
      %28 = sbr.rel (0) target = $region25
    $region24: #{encoder_rnn_forward.3} parent=1 // pred_region
      _
    $region25: #{encoder_rnn_forward.3} parent=1 // pred_fallthru
      _
    // Predicated region
    $region26: #{encoder_rnn_forward.3} parent=1 // pred_check
      _
    $region27: #{encoder_rnn_forward.3} parent=1 // pred_check_branch
      %30 = sbr.rel (0) target = $region29
    $region28: #{encoder_rnn_forward.3} parent=1 // pred_region
      _
    $region29: #{encoder_rnn_forward.3} parent=1 // pred_fallthru
      _
    // Predicated region
    $region30: #{encoder_rnn_forward.3} parent=1 // pred_check
      _
    $region31: #{encoder_rnn_forward.3} parent=1 // pred_check_branch
      %32 = sbr.rel (0) target = $region33
    $region32: #{encoder_rnn_forward.3} parent=1 // pred_region
      _
    $region33: #{encoder_rnn_forward.3} parent=1 // pred_fallthru
      _
    %v33 = vld [vmem:[%s4] sm:$0xff]
    %v34 = vld [vmem:[%s4 + $0x8] sm:$0xff]
    %v35 = vld [vmem:[%s4 + $0x10] sm:$0xff]
    %v36 = vld [vmem:[%s4 + $0x18] sm:$0xff]
    %v37 = vld [vmem:[%s5] sm:$0xff]
    %v38 = vld [vmem:[%s5 + $0x8] sm:$0xff]
    %v39 = vld [vmem:[%s5 + $0x10] sm:$0xff]
    %v40 = vld [vmem:[%s5 + $0x18] sm:$0xff]
    %v41 = vld [vmem:[%s6] sm:$0xff]
    %v42 = vld [vmem:[%s6 + $0x8] sm:$0xff]
    %v43 = vld [vmem:[%s6 + $0x10] sm:$0xff]
    %v44 = vld [vmem:[%s6 + $0x18] sm:$0xff]
    %v45 = vld [vmem:[%s7] sm:$0x1]
    %v46 = vld [vmem:[%s3] sm:$0xff]
    %vm47 = vcmask 261120
    %v49 = vsel %vm47, %v46, 0
    %51 = vmatprep.subr.mxu0 0.0
    %52 = vmatpush1.msra.mxu0 %v33
    %53 = vmatprep.subr.mxu0 0.0
    %54 = vmatpush1.msra.mxu0 %v34
    %55 = vmatprep.subr.mxu0 0.0
    %56 = vmatpush1.msra.mxu0 %v35
    %57 = vmatprep.subr.mxu0 0.0
    %58 = vmatpush1.msra.mxu0 %v36
    %59 = vmatprep.subr.mxu0 0.0
    %60 = vmatpush1.msra.mxu0 0.0
    %61 = vmatprep.subr.mxu0 0.0
    %62 = vmatpush1.msra.mxu0 0.0
    %63 = vmatprep.subr.mxu0 0.0
    %64 = vmatpush1.msra.mxu0 0.0
    %65 = vmatprep.subr.mxu0 0.0
    %66 = vmatpush1.msra.mxu0 0.0
    %67 = vmatprep.subr.mxu0 0.0
    %68 = vmatpush1.msra.mxu0 0.0
    %69 = vmatprep.subr.mxu0 0.0
    %70 = vmatpush1.msra.mxu0 0.0
    %71 = vmatprep.subr.mxu0 0.0
    %72 = vmatpush1.msra.mxu0 0.0
    %73 = vmatprep.subr.mxu0 0.0
    %74 = vmatpush1.msra.mxu0 0.0
    %75 = vmatprep.subr.mxu0 0.0
    %76 = vmatpush1.msra.mxu0 0.0
    %77 = vmatprep.subr.mxu0 0.0
    %78 = vmatpush1.msra.mxu0 0.0
    %79 = vmatprep.subr.mxu0 0.0
    %80 = vmatpush1.msra.mxu0 0.0
    %81 = vmatprep.subr.mxu0 0.0
    %82 = vmatpush1.msra.mxu0 0.0
    %83 = vmatprep.subr.mxu0 0.0
    %84 = vmatpush1.msra.mxu0 0.0
    %85 = vmatprep.subr.mxu0 0.0
    %86 = vmatpush1.msra.mxu0 0.0
    %87 = vmatprep.subr.mxu0 0.0
    %88 = vmatpush1.msra.mxu0 0.0
    %89 = vmatprep.subr.mxu0 0.0
    %90 = vmatpush1.msra.mxu0 0.0
    %91 = vmatprep.subr.mxu0 0.0
    %92 = vmatpush1.msra.mxu0 0.0
    %93 = vmatprep.subr.mxu0 0.0
    %94 = vmatpush1.msra.mxu0 0.0
    %95 = vmatprep.subr.mxu0 0.0
    %96 = vmatpush1.msra.mxu0 0.0
    %97 = vmatprep.subr.mxu0 0.0
    %98 = vmatpush1.msra.mxu0 0.0
    %99 = vmatprep.subr.mxu0 0.0
    %100 = vmatpush1.msra.mxu0 0.0
    %101 = vmatprep.subr.mxu0 0.0
    %102 = vmatpush1.msra.mxu0 0.0
    %103 = vmatprep.subr.mxu0 0.0
    %104 = vmatpush1.msra.mxu0 0.0
    %105 = vmatprep.subr.mxu0 0.0
    %106 = vmatpush1.msra.mxu0 0.0
    %107 = vmatprep.subr.mxu0 0.0
    %108 = vmatpush1.msra.mxu0 0.0
    %109 = vmatprep.subr.mxu0 0.0
    %110 = vmatpush1.msra.mxu0 0.0
    %111 = vmatprep.subr.mxu0 0.0
    %112 = vmatpush1.msra.mxu0 0.0
    %113 = vmatprep.subr.mxu0 0.0
    %114 = vmatpush1.msra.mxu0 0.0
    %115 = vmatprep.mubr.f32.mxu0 0.0
    %116 = vmatmul.mubr.f32.gmra.mrb[0].mxu0 %v49
    %v117 = vpop.f32.mrb[0].mxu0
    %v118 = vadd.f32 0.0, %v117
    %v119 = vpop.f32.mrb[0].mxu0
    %120 = vdwg.mxu0
    %121 = vmatprep.subr.mxu0 0.0
    %122 = vmatpush1.msra.mxu0 %v37
    %123 = vmatprep.subr.mxu0 0.0
    %124 = vmatpush1.msra.mxu0 %v38
    %125 = vmatprep.subr.mxu0 0.0
    %126 = vmatpush1.msra.mxu0 %v39
    %127 = vmatprep.subr.mxu0 0.0
    %128 = vmatpush1.msra.mxu0 %v40
    %129 = vmatprep.subr.mxu0 0.0
    %130 = vmatpush1.msra.mxu0 0.0
    %131 = vmatprep.subr.mxu0 0.0
    %132 = vmatpush1.msra.mxu0 0.0
    %133 = vmatprep.subr.mxu0 0.0
    %134 = vmatpush1.msra.mxu0 0.0
    %135 = vmatprep.subr.mxu0 0.0
    %136 = vmatpush1.msra.mxu0 0.0
    %137 = vmatprep.subr.mxu0 0.0
    %138 = vmatpush1.msra.mxu0 0.0
    %139 = vmatprep.subr.mxu0 0.0
    %140 = vmatpush1.msra.mxu0 0.0
    %141 = vmatprep.subr.mxu0 0.0
    %142 = vmatpush1.msra.mxu0 0.0
    %143 = vmatprep.subr.mxu0 0.0
    %144 = vmatpush1.msra.mxu0 0.0
    %145 = vmatprep.subr.mxu0 0.0
    %146 = vmatpush1.msra.mxu0 0.0
    %147 = vmatprep.subr.mxu0 0.0
    %148 = vmatpush1.msra.mxu0 0.0
    %149 = vmatprep.subr.mxu0 0.0
    %150 = vmatpush1.msra.mxu0 0.0
    %151 = vmatprep.subr.mxu0 0.0
    %152 = vmatpush1.msra.mxu0 0.0
    %153 = vmatprep.subr.mxu0 0.0
    %154 = vmatpush1.msra.mxu0 0.0
    %155 = vmatprep.subr.mxu0 0.0
    %156 = vmatpush1.msra.mxu0 0.0
    %157 = vmatprep.subr.mxu0 0.0
    %158 = vmatpush1.msra.mxu0 0.0
    %159 = vmatprep.subr.mxu0 0.0
    %160 = vmatpush1.msra.mxu0 0.0
    %161 = vmatprep.subr.mxu0 0.0
    %162 = vmatpush1.msra.mxu0 0.0
    %163 = vmatprep.subr.mxu0 0.0
    %164 = vmatpush1.msra.mxu0 0.0
    %165 = vmatprep.subr.mxu0 0.0
    %166 = vmatpush1.msra.mxu0 0.0
    %167 = vmatprep.subr.mxu0 0.0
    %168 = vmatpush1.msra.mxu0 0.0
    %169 = vmatprep.subr.mxu0 0.0
    %170 = vmatpush1.msra.mxu0 0.0
    %171 = vmatprep.subr.mxu0 0.0
    %172 = vmatpush1.msra.mxu0 0.0
    %173 = vmatprep.subr.mxu0 0.0
    %174 = vmatpush1.msra.mxu0 0.0
    %175 = vmatprep.subr.mxu0 0.0
    %176 = vmatpush1.msra.mxu0 0.0
    %177 = vmatprep.subr.mxu0 0.0
    %178 = vmatpush1.msra.mxu0 0.0
    %179 = vmatprep.subr.mxu0 0.0
    %180 = vmatpush1.msra.mxu0 0.0
    %181 = vmatprep.subr.mxu0 0.0
    %182 = vmatpush1.msra.mxu0 0.0
    %183 = vmatprep.subr.mxu0 0.0
    %184 = vmatpush1.msra.mxu0 0.0
    %185 = vmatprep.mubr.f32.mxu0 0.0
    %186 = vmatmul.mubr.f32.gmra.mrb[0].mxu0 %v49
    %v187 = vpop.f32.mrb[0].mxu0
    %v188 = vadd.f32 0.0, %v187
    %v189 = vpop.f32.mrb[0].mxu0
    %190 = vdwg.mxu0
    %v192 = vlaneseq
    %v193 = vshrl.u32 %v192, 7
    %v194 = vsub.s32 0, %v193
    %v195 = vrot.slane %v45, %v194
    %197 = vmatprep.subr.mxu0 0.0
    %198 = vmatpush1.msra.mxu0 %v41
    %199 = vmatprep.subr.mxu0 0.0
    %200 = vmatpush1.msra.mxu0 %v42
    %201 = vmatprep.subr.mxu0 0.0
    %202 = vmatpush1.msra.mxu0 %v43
    %203 = vmatprep.subr.mxu0 0.0
    %204 = vmatpush1.msra.mxu0 %v44
    %205 = vmatprep.subr.mxu0 0.0
    %206 = vmatpush1.msra.mxu0 0.0
    %207 = vmatprep.subr.mxu0 0.0
    %208 = vmatpush1.msra.mxu0 0.0
    %209 = vmatprep.subr.mxu0 0.0
    %210 = vmatpush1.msra.mxu0 0.0
    %211 = vmatprep.subr.mxu0 0.0
    %212 = vmatpush1.msra.mxu0 0.0
    %213 = vmatprep.subr.mxu0 0.0
    %214 = vmatpush1.msra.mxu0 0.0
    %215 = vmatprep.subr.mxu0 0.0
    %216 = vmatpush1.msra.mxu0 0.0
    %217 = vmatprep.subr.mxu0 0.0
    %218 = vmatpush1.msra.mxu0 0.0
    %219 = vmatprep.subr.mxu0 0.0
    %220 = vmatpush1.msra.mxu0 0.0
    %221 = vmatprep.subr.mxu0 0.0
    %222 = vmatpush1.msra.mxu0 0.0
    %223 = vmatprep.subr.mxu0 0.0
    %224 = vmatpush1.msra.mxu0 0.0
    %225 = vmatprep.subr.mxu0 0.0
    %226 = vmatpush1.msra.mxu0 0.0
    %227 = vmatprep.subr.mxu0 0.0
    %228 = vmatpush1.msra.mxu0 0.0
    %229 = vmatprep.subr.mxu0 0.0
    %230 = vmatpush1.msra.mxu0 0.0
    %231 = vmatprep.subr.mxu0 0.0
    %232 = vmatpush1.msra.mxu0 0.0
    %233 = vmatprep.subr.mxu0 0.0
    %234 = vmatpush1.msra.mxu0 0.0
    %235 = vmatprep.subr.mxu0 0.0
    %236 = vmatpush1.msra.mxu0 0.0
    %237 = vmatprep.subr.mxu0 0.0
    %238 = vmatpush1.msra.mxu0 0.0
    %239 = vmatprep.subr.mxu0 0.0
    %240 = vmatpush1.msra.mxu0 0.0
    %241 = vmatprep.subr.mxu0 0.0
    %242 = vmatpush1.msra.mxu0 0.0
    %243 = vmatprep.subr.mxu0 0.0
    %244 = vmatpush1.msra.mxu0 0.0
    %245 = vmatprep.subr.mxu0 0.0
    %246 = vmatpush1.msra.mxu0 0.0
    %247 = vmatprep.subr.mxu0 0.0
    %248 = vmatpush1.msra.mxu0 0.0
    %249 = vmatprep.subr.mxu0 0.0
    %250 = vmatpush1.msra.mxu0 0.0
    %251 = vmatprep.subr.mxu0 0.0
    %252 = vmatpush1.msra.mxu0 0.0
    %253 = vmatprep.subr.mxu0 0.0
    %254 = vmatpush1.msra.mxu0 0.0
    %255 = vmatprep.subr.mxu0 0.0
    %256 = vmatpush1.msra.mxu0 0.0
    %257 = vmatprep.subr.mxu0 0.0
    %258 = vmatpush1.msra.mxu0 0.0
    %259 = vmatprep.subr.mxu0 0.0
    %260 = vmatpush1.msra.mxu0 0.0
    %261 = vmatprep.mubr.f32.mxu0 0.0
    %262 = vmatmul.mubr.f32.gmra.mrb[0].mxu0 %v49
    %v263 = vpop.f32.mrb[0].mxu0
    %v264 = vadd.f32 %v195, %v263
    %v265 = vpop.f32.mrb[0].mxu0
    %266 = vdwg.mxu0
    %v267 = vld [vmem:[%s0] sm:$0xff]
    %v268 = vadd.f32 %v267, %v118
    %v269 = vxor.u32 %v268, 2147483648
    %v270 = vmul.f32 %v269, 1.442695
    %v271 = vpow.pop %v270
    %v272 = vadd.f32 %v271, 1.0
    %v273 = vrcp.pop %v272
    %v274 = vmul.f32 1.0, %v273
    %v275 = vld [vmem:[%s1] sm:$0xff]
    %v276 = vadd.f32 %v275, %v188
    %v277 = vxor.u32 %v276, 2147483648
    %v278 = vmul.f32 %v277, 1.442695
    %v279 = vpow.pop %v278
    %v280 = vadd.f32 %v279, 1.0
    %v281 = vrcp.pop %v280
    %v282 = vmul.f32 1.0, %v281
    %v283 = vld [vmem:[%s2] sm:$0xff]
    %v284 = vmul.f32 %v274, %v264
    %v285 = vadd.f32 %v283, %v284
    %v286 = vtanh.pop %v285
    %v287 = vsub.f32 1.0, %v282
    %v288 = vmul.f32 %v287, %v286
    %v289 = vmul.f32 %v282, %v46
    %v290 = vadd.f32 %v288, %v289
    %291 = vst.msk [vmem:[#allocation2] sm:$0xff] %vm47, %v290
    %v293 = vsel %vm47, %v290, 0
    %295 = vmatprep.subr.mxu0 0.0
    %296 = vmatpush1.msra.mxu0 %v33
    %297 = vmatprep.subr.mxu0 0.0
    %298 = vmatpush1.msra.mxu0 %v34
    %299 = vmatprep.subr.mxu0 0.0
    %300 = vmatpush1.msra.mxu0 %v35
    %301 = vmatprep.subr.mxu0 0.0
    %302 = vmatpush1.msra.mxu0 %v36
    %303 = vmatprep.subr.mxu0 0.0
    %304 = vmatpush1.msra.mxu0 0.0
    %305 = vmatprep.subr.mxu0 0.0
    %306 = vmatpush1.msra.mxu0 0.0
    %307 = vmatprep.subr.mxu0 0.0
    %308 = vmatpush1.msra.mxu0 0.0
    %309 = vmatprep.subr.mxu0 0.0
    %310 = vmatpush1.msra.mxu0 0.0
    %311 = vmatprep.subr.mxu0 0.0
    %312 = vmatpush1.msra.mxu0 0.0
    %313 = vmatprep.subr.mxu0 0.0
    %314 = vmatpush1.msra.mxu0 0.0
    %315 = vmatprep.subr.mxu0 0.0
    %316 = vmatpush1.msra.mxu0 0.0
    %317 = vmatprep.subr.mxu0 0.0
    %318 = vmatpush1.msra.mxu0 0.0
    %319 = vmatprep.subr.mxu0 0.0
    %320 = vmatpush1.msra.mxu0 0.0
    %321 = vmatprep.subr.mxu0 0.0
    %322 = vmatpush1.msra.mxu0 0.0
    %323 = vmatprep.subr.mxu0 0.0
    %324 = vmatpush1.msra.mxu0 0.0
    %325 = vmatprep.subr.mxu0 0.0
    %326 = vmatpush1.msra.mxu0 0.0
    %327 = vmatprep.subr.mxu0 0.0
    %328 = vmatpush1.msra.mxu0 0.0
    %329 = vmatprep.subr.mxu0 0.0
    %330 = vmatpush1.msra.mxu0 0.0
    %331 = vmatprep.subr.mxu0 0.0
    %332 = vmatpush1.msra.mxu0 0.0
    %333 = vmatprep.subr.mxu0 0.0
    %334 = vmatpush1.msra.mxu0 0.0
    %335 = vmatprep.subr.mxu0 0.0
    %336 = vmatpush1.msra.mxu0 0.0
    %337 = vmatprep.subr.mxu0 0.0
    %338 = vmatpush1.msra.mxu0 0.0
    %339 = vmatprep.subr.mxu0 0.0
    %340 = vmatpush1.msra.mxu0 0.0
    %341 = vmatprep.subr.mxu0 0.0
    %342 = vmatpush1.msra.mxu0 0.0
    %343 = vmatprep.subr.mxu0 0.0
    %344 = vmatpush1.msra.mxu0 0.0
    %345 = vmatprep.subr.mxu0 0.0
    %346 = vmatpush1.msra.mxu0 0.0
    %347 = vmatprep.subr.mxu0 0.0
    %348 = vmatpush1.msra.mxu0 0.0
    %349 = vmatprep.subr.mxu0 0.0
    %350 = vmatpush1.msra.mxu0 0.0
    %351 = vmatprep.subr.mxu0 0.0
    %352 = vmatpush1.msra.mxu0 0.0
    %353 = vmatprep.subr.mxu0 0.0
    %354 = vmatpush1.msra.mxu0 0.0
    %355 = vmatprep.subr.mxu0 0.0
    %356 = vmatpush1.msra.mxu0 0.0
    %357 = vmatprep.subr.mxu0 0.0
    %358 = vmatpush1.msra.mxu0 0.0
    %359 = vmatprep.mubr.f32.mxu0 0.0
    %360 = vmatmul.mubr.f32.gmra.mrb[0].mxu0 %v293
    %v361 = vpop.f32.mrb[0].mxu0
    %v362 = vadd.f32 0.0, %v361
    %v363 = vpop.f32.mrb[0].mxu0
    %364 = vdwg.mxu0
    %365 = vmatprep.subr.mxu0 0.0
    %366 = vmatpush1.msra.mxu0 %v37
    %367 = vmatprep.subr.mxu0 0.0
    %368 = vmatpush1.msra.mxu0 %v38
    %369 = vmatprep.subr.mxu0 0.0
    %370 = vmatpush1.msra.mxu0 %v39
    %371 = vmatprep.subr.mxu0 0.0
    %372 = vmatpush1.msra.mxu0 %v40
    %373 = vmatprep.subr.mxu0 0.0
    %374 = vmatpush1.msra.mxu0 0.0
    %375 = vmatprep.subr.mxu0 0.0
    %376 = vmatpush1.msra.mxu0 0.0
    %377 = vmatprep.subr.mxu0 0.0
    %378 = vmatpush1.msra.mxu0 0.0
    %379 = vmatprep.subr.mxu0 0.0
    %380 = vmatpush1.msra.mxu0 0.0
    %381 = vmatprep.subr.mxu0 0.0
    %382 = vmatpush1.msra.mxu0 0.0
    %383 = vmatprep.subr.mxu0 0.0
    %384 = vmatpush1.msra.mxu0 0.0
    %385 = vmatprep.subr.mxu0 0.0
    %386 = vmatpush1.msra.mxu0 0.0
    %387 = vmatprep.subr.mxu0 0.0
    %388 = vmatpush1.msra.mxu0 0.0
    %389 = vmatprep.subr.mxu0 0.0
    %390 = vmatpush1.msra.mxu0 0.0
    %391 = vmatprep.subr.mxu0 0.0
    %392 = vmatpush1.msra.mxu0 0.0
    %393 = vmatprep.subr.mxu0 0.0
    %394 = vmatpush1.msra.mxu0 0.0
    %395 = vmatprep.subr.mxu0 0.0
    %396 = vmatpush1.msra.mxu0 0.0
    %397 = vmatprep.subr.mxu0 0.0
    %398 = vmatpush1.msra.mxu0 0.0
    %399 = vmatprep.subr.mxu0 0.0
    %400 = vmatpush1.msra.mxu0 0.0
    %401 = vmatprep.subr.mxu0 0.0
    %402 = vmatpush1.msra.mxu0 0.0
    %403 = vmatprep.subr.mxu0 0.0
    %404 = vmatpush1.msra.mxu0 0.0
    %405 = vmatprep.subr.mxu0 0.0
    %406 = vmatpush1.msra.mxu0 0.0
    %407 = vmatprep.subr.mxu0 0.0
    %408 = vmatpush1.msra.mxu0 0.0
    %409 = vmatprep.subr.mxu0 0.0
    %410 = vmatpush1.msra.mxu0 0.0
    %411 = vmatprep.subr.mxu0 0.0
    %412 = vmatpush1.msra.mxu0 0.0
    %413 = vmatprep.subr.mxu0 0.0
    %414 = vmatpush1.msra.mxu0 0.0
    %415 = vmatprep.subr.mxu0 0.0
    %416 = vmatpush1.msra.mxu0 0.0
    %417 = vmatprep.subr.mxu0 0.0
    %418 = vmatpush1.msra.mxu0 0.0
    %419 = vmatprep.subr.mxu0 0.0
    %420 = vmatpush1.msra.mxu0 0.0
    %421 = vmatprep.subr.mxu0 0.0
    %422 = vmatpush1.msra.mxu0 0.0
    %423 = vmatprep.subr.mxu0 0.0
    %424 = vmatpush1.msra.mxu0 0.0
    %425 = vmatprep.subr.mxu0 0.0
    %426 = vmatpush1.msra.mxu0 0.0
    %427 = vmatprep.subr.mxu0 0.0
    %428 = vmatpush1.msra.mxu0 0.0
    %429 = vmatprep.mubr.f32.mxu0 0.0
    %430 = vmatmul.mubr.f32.gmra.mrb[0].mxu0 %v293
    %v431 = vpop.f32.mrb[0].mxu0
    %v432 = vadd.f32 0.0, %v431
    %v433 = vpop.f32.mrb[0].mxu0
    %434 = vdwg.mxu0
    %435 = vmatprep.subr.mxu0 0.0
    %436 = vmatpush1.msra.mxu0 %v41
    %437 = vmatprep.subr.mxu0 0.0
    %438 = vmatpush1.msra.mxu0 %v42
    %439 = vmatprep.subr.mxu0 0.0
    %440 = vmatpush1.msra.mxu0 %v43
    %441 = vmatprep.subr.mxu0 0.0
    %442 = vmatpush1.msra.mxu0 %v44
    %443 = vmatprep.subr.mxu0 0.0
    %444 = vmatpush1.msra.mxu0 0.0
    %445 = vmatprep.subr.mxu0 0.0
    %446 = vmatpush1.msra.mxu0 0.0
    %447 = vmatprep.subr.mxu0 0.0
    %448 = vmatpush1.msra.mxu0 0.0
    %449 = vmatprep.subr.mxu0 0.0
    %450 = vmatpush1.msra.mxu0 0.0
    %451 = vmatprep.subr.mxu0 0.0
    %452 = vmatpush1.msra.mxu0 0.0
    %453 = vmatprep.subr.mxu0 0.0
    %454 = vmatpush1.msra.mxu0 0.0
    %455 = vmatprep.subr.mxu0 0.0
    %456 = vmatpush1.msra.mxu0 0.0
    %457 = vmatprep.subr.mxu0 0.0
    %458 = vmatpush1.msra.mxu0 0.0
    %459 = vmatprep.subr.mxu0 0.0
    %460 = vmatpush1.msra.mxu0 0.0
    %461 = vmatprep.subr.mxu0 0.0
    %462 = vmatpush1.msra.mxu0 0.0
    %463 = vmatprep.subr.mxu0 0.0
    %464 = vmatpush1.msra.mxu0 0.0
    %465 = vmatprep.subr.mxu0 0.0
    %466 = vmatpush1.msra.mxu0 0.0
    %467 = vmatprep.subr.mxu0 0.0
    %468 = vmatpush1.msra.mxu0 0.0
    %469 = vmatprep.subr.mxu0 0.0
    %470 = vmatpush1.msra.mxu0 0.0
    %471 = vmatprep.subr.mxu0 0.0
    %472 = vmatpush1.msra.mxu0 0.0
    %473 = vmatprep.subr.mxu0 0.0
    %474 = vmatpush1.msra.mxu0 0.0
    %475 = vmatprep.subr.mxu0 0.0
    %476 = vmatpush1.msra.mxu0 0.0
    %477 = vmatprep.subr.mxu0 0.0
    %478 = vmatpush1.msra.mxu0 0.0
    %479 = vmatprep.subr.mxu0 0.0
    %480 = vmatpush1.msra.mxu0 0.0
    %481 = vmatprep.subr.mxu0 0.0
    %482 = vmatpush1.msra.mxu0 0.0
    %483 = vmatprep.subr.mxu0 0.0
    %484 = vmatpush1.msra.mxu0 0.0
    %485 = vmatprep.subr.mxu0 0.0
    %486 = vmatpush1.msra.mxu0 0.0
    %487 = vmatprep.subr.mxu0 0.0
    %488 = vmatpush1.msra.mxu0 0.0
    %489 = vmatprep.subr.mxu0 0.0
    %490 = vmatpush1.msra.mxu0 0.0
    %491 = vmatprep.subr.mxu0 0.0
    %492 = vmatpush1.msra.mxu0 0.0
    %493 = vmatprep.subr.mxu0 0.0
    %494 = vmatpush1.msra.mxu0 0.0
    %495 = vmatprep.subr.mxu0 0.0
    %496 = vmatpush1.msra.mxu0 0.0
    %497 = vmatprep.subr.mxu0 0.0
    %498 = vmatpush1.msra.mxu0 0.0
    %499 = vmatprep.mubr.f32.mxu0 0.0
    %500 = vmatmul.mubr.f32.gmra.mrb[0].mxu0 %v293
    %v501 = vpop.f32.mrb[0].mxu0
    %v502 = vadd.f32 %v195, %v501
    %v503 = vpop.f32.mrb[0].mxu0
    %504 = vdwg.mxu0
    %s505 = scalar_lea.vmem %s0, 8
    %v506 = vld [vmem:[%s505] sm:$0xff]
    %v507 = vadd.f32 %v506, %v362
    %v508 = vxor.u32 %v507, 2147483648
    %v509 = vmul.f32 %v508, 1.442695
    %v510 = vpow.pop %v509
    %v511 = vadd.f32 %v510, 1.0
    %v512 = vrcp.pop %v511
    %v513 = vmul.f32 1.0, %v512
    %s514 = scalar_lea.vmem %s1, 8
    %v515 = vld [vmem:[%s514] sm:$0xff]
    %v516 = vadd.f32 %v515, %v432
    %v517 = vxor.u32 %v516, 2147483648
    %v518 = vmul.f32 %v517, 1.442695
    %v519 = vpow.pop %v518
    %v520 = vadd.f32 %v519, 1.0
    %v521 = vrcp.pop %v520
    %v522 = vmul.f32 1.0, %v521
    %s523 = scalar_lea.vmem %s2, 8
    %v524 = vld [vmem:[%s523] sm:$0xff]
    %v525 = vmul.f32 %v513, %v502
    %v526 = vadd.f32 %v524, %v525
    %v527 = vtanh.pop %v526
    %v528 = vsub.f32 1.0, %v522
    %v529 = vmul.f32 %v528, %v527
    %v530 = vmul.f32 %v522, %v290
    %v531 = vadd.f32 %v529, %v530
    %s532 = scalar_lea.vmem [#allocation2], 8
    %533 = vst.msk [vmem:[%s532] sm:$0xff] %vm47, %v531
    %v535 = vsel %vm47, %v531, 0
    %537 = vmatprep.subr.mxu0 0.0
    %538 = vmatpush1.msra.mxu0 %v33
    %539 = vmatprep.subr.mxu0 0.0
    %540 = vmatpush1.msra.mxu0 %v34
    %541 = vmatprep.subr.mxu0 0.0
    %542 = vmatpush1.msra.mxu0 %v35
    %543 = vmatprep.subr.mxu0 0.0
    %544 = vmatpush1.msra.mxu0 %v36
    %545 = vmatprep.subr.mxu0 0.0
    %546 = vmatpush1.msra.mxu0 0.0
    %547 = vmatprep.subr.mxu0 0.0
    %548 = vmatpush1.msra.mxu0 0.0
    %549 = vmatprep.subr.mxu0 0.0
    %550 = vmatpush1.msra.mxu0 0.0
    %551 = vmatprep.subr.mxu0 0.0
    %552 = vmatpush1.msra.mxu0 0.0
    %553 = vmatprep.subr.mxu0 0.0
    %554 = vmatpush1.msra.mxu0 0.0
    %555 = vmatprep.subr.mxu0 0.0
    %556 = vmatpush1.msra.mxu0 0.0
    %557 = vmatprep.subr.mxu0 0.0
    %558 = vmatpush1.msra.mxu0 0.0
    %559 = vmatprep.subr.mxu0 0.0
    %560 = vmatpush1.msra.mxu0 0.0
    %561 = vmatprep.subr.mxu0 0.0
    %562 = vmatpush1.msra.mxu0 0.0
    %563 = vmatprep.subr.mxu0 0.0
    %564 = vmatpush1.msra.mxu0 0.0
    %565 = vmatprep.subr.mxu0 0.0
    %566 = vmatpush1.msra.mxu0 0.0
    %567 = vmatprep.subr.mxu0 0.0
    %568 = vmatpush1.msra.mxu0 0.0
    %569 = vmatprep.subr.mxu0 0.0
    %570 = vmatpush1.msra.mxu0 0.0
    %571 = vmatprep.subr.mxu0 0.0
    %572 = vmatpush1.msra.mxu0 0.0
    %573 = vmatprep.subr.mxu0 0.0
    %574 = vmatpush1.msra.mxu0 0.0
    %575 = vmatprep.subr.mxu0 0.0
    %576 = vmatpush1.msra.mxu0 0.0
    %577 = vmatprep.subr.mxu0 0.0
    %578 = vmatpush1.msra.mxu0 0.0
    %579 = vmatprep.subr.mxu0 0.0
    %580 = vmatpush1.msra.mxu0 0.0
    %581 = vmatprep.subr.mxu0 0.0
    %582 = vmatpush1.msra.mxu0 0.0
    %583 = vmatprep.subr.mxu0 0.0
    %584 = vmatpush1.msra.mxu0 0.0
    %585 = vmatprep.subr.mxu0 0.0
    %586 = vmatpush1.msra.mxu0 0.0
    %587 = vmatprep.subr.mxu0 0.0
    %588 = vmatpush1.msra.mxu0 0.0
    %589 = vmatprep.subr.mxu0 0.0
    %590 = vmatpush1.msra.mxu0 0.0
    %591 = vmatprep.subr.mxu0 0.0
    %592 = vmatpush1.msra.mxu0 0.0
    %593 = vmatprep.subr.mxu0 0.0
    %594 = vmatpush1.msra.mxu0 0.0
    %595 = vmatprep.subr.mxu0 0.0
    %596 = vmatpush1.msra.mxu0 0.0
    %597 = vmatprep.subr.mxu0 0.0
    %598 = vmatpush1.msra.mxu0 0.0
    %599 = vmatprep.subr.mxu0 0.0
    %600 = vmatpush1.msra.mxu0 0.0
    %601 = vmatprep.mubr.f32.mxu0 0.0
    %602 = vmatmul.mubr.f32.gmra.mrb[0].mxu0 %v535
    %v603 = vpop.f32.mrb[0].mxu0
    %v604 = vadd.f32 0.0, %v603
    %v605 = vpop.f32.mrb[0].mxu0
    %606 = vdwg.mxu0
    %607 = vmatprep.subr.mxu0 0.0
    %608 = vmatpush1.msra.mxu0 %v37
    %609 = vmatprep.subr.mxu0 0.0
    %610 = vmatpush1.msra.mxu0 %v38
    %611 = vmatprep.subr.mxu0 0.0
    %612 = vmatpush1.msra.mxu0 %v39
    %613 = vmatprep.subr.mxu0 0.0
    %614 = vmatpush1.msra.mxu0 %v40
    %615 = vmatprep.subr.mxu0 0.0
    %616 = vmatpush1.msra.mxu0 0.0
    %617 = vmatprep.subr.mxu0 0.0
    %618 = vmatpush1.msra.mxu0 0.0
    %619 = vmatprep.subr.mxu0 0.0
    %620 = vmatpush1.msra.mxu0 0.0
    %621 = vmatprep.subr.mxu0 0.0
    %622 = vmatpush1.msra.mxu0 0.0
    %623 = vmatprep.subr.mxu0 0.0
    %624 = vmatpush1.msra.mxu0 0.0
    %625 = vmatprep.subr.mxu0 0.0
    %626 = vmatpush1.msra.mxu0 0.0
    %627 = vmatprep.subr.mxu0 0.0
    %628 = vmatpush1.msra.mxu0 0.0
    %629 = vmatprep.subr.mxu0 0.0
    %630 = vmatpush1.msra.mxu0 0.0
    %631 = vmatprep.subr.mxu0 0.0
    %632 = vmatpush1.msra.mxu0 0.0
    %633 = vmatprep.subr.mxu0 0.0
    %634 = vmatpush1.msra.mxu0 0.0
    %635 = vmatprep.subr.mxu0 0.0
    %636 = vmatpush1.msra.mxu0 0.0
    %637 = vmatprep.subr.mxu0 0.0
    %638 = vmatpush1.msra.mxu0 0.0
    %639 = vmatprep.subr.mxu0 0.0
    %640 = vmatpush1.msra.mxu0 0.0
    %641 = vmatprep.subr.mxu0 0.0
    %642 = vmatpush1.msra.mxu0 0.0
    %643 = vmatprep.subr.mxu0 0.0
    %644 = vmatpush1.msra.mxu0 0.0
    %645 = vmatprep.subr.mxu0 0.0
    %646 = vmatpush1.msra.mxu0 0.0
    %647 = vmatprep.subr.mxu0 0.0
    %648 = vmatpush1.msra.mxu0 0.0
    %649 = vmatprep.subr.mxu0 0.0
    %650 = vmatpush1.msra.mxu0 0.0
    %651 = vmatprep.subr.mxu0 0.0
    %652 = vmatpush1.msra.mxu0 0.0
    %653 = vmatprep.subr.mxu0 0.0
    %654 = vmatpush1.msra.mxu0 0.0
    %655 = vmatprep.subr.mxu0 0.0
    %656 = vmatpush1.msra.mxu0 0.0
    %657 = vmatprep.subr.mxu0 0.0
    %658 = vmatpush1.msra.mxu0 0.0
    %659 = vmatprep.subr.mxu0 0.0
    %660 = vmatpush1.msra.mxu0 0.0
    %661 = vmatprep.subr.mxu0 0.0
    %662 = vmatpush1.msra.mxu0 0.0
    %663 = vmatprep.subr.mxu0 0.0
    %664 = vmatpush1.msra.mxu0 0.0
    %665 = vmatprep.subr.mxu0 0.0
    %666 = vmatpush1.msra.mxu0 0.0
    %667 = vmatprep.subr.mxu0 0.0
    %668 = vmatpush1.msra.mxu0 0.0
    %669 = vmatprep.subr.mxu0 0.0
    %670 = vmatpush1.msra.mxu0 0.0
    %671 = vmatprep.mubr.f32.mxu0 0.0
    %672 = vmatmul.mubr.f32.gmra.mrb[0].mxu0 %v535
    %v673 = vpop.f32.mrb[0].mxu0
    %v674 = vadd.f32 0.0, %v673
    %v675 = vpop.f32.mrb[0].mxu0
    %676 = vdwg.mxu0
    %677 = vmatprep.subr.mxu0 0.0
    %678 = vmatpush1.msra.mxu0 %v41
    %679 = vmatprep.subr.mxu0 0.0
    %680 = vmatpush1.msra.mxu0 %v42
    %681 = vmatprep.subr.mxu0 0.0
    %682 = vmatpush1.msra.mxu0 %v43
    %683 = vmatprep.subr.mxu0 0.0
    %684 = vmatpush1.msra.mxu0 %v44
    %685 = vmatprep.subr.mxu0 0.0
    %686 = vmatpush1.msra.mxu0 0.0
    %687 = vmatprep.subr.mxu0 0.0
    %688 = vmatpush1.msra.mxu0 0.0
    %689 = vmatprep.subr.mxu0 0.0
    %690 = vmatpush1.msra.mxu0 0.0
    %691 = vmatprep.subr.mxu0 0.0
    %692 = vmatpush1.msra.mxu0 0.0
    %693 = vmatprep.subr.mxu0 0.0
    %694 = vmatpush1.msra.mxu0 0.0
    %695 = vmatprep.subr.mxu0 0.0
    %696 = vmatpush1.msra.mxu0 0.0
    %697 = vmatprep.subr.mxu0 0.0
    %698 = vmatpush1.msra.mxu0 0.0
    %699 = vmatprep.subr.mxu0 0.0
    %700 = vmatpush1.msra.mxu0 0.0
    %701 = vmatprep.subr.mxu0 0.0
    %702 = vmatpush1.msra.mxu0 0.0
    %703 = vmatprep.subr.mxu0 0.0
    %704 = vmatpush1.msra.mxu0 0.0
    %705 = vmatprep.subr.mxu0 0.0
    %706 = vmatpush1.msra.mxu0 0.0
    %707 = vmatprep.subr.mxu0 0.0
    %708 = vmatpush1.msra.mxu0 0.0
    %709 = vmatprep.subr.mxu0 0.0
    %710 = vmatpush1.msra.mxu0 0.0
    %711 = vmatprep.subr.mxu0 0.0
    %712 = vmatpush1.msra.mxu0 0.0
    %713 = vmatprep.subr.mxu0 0.0
    %714 = vmatpush1.msra.mxu0 0.0
    %715 = vmatprep.subr.mxu0 0.0
    %716 = vmatpush1.msra.mxu0 0.0
    %717 = vmatprep.subr.mxu0 0.0
    %718 = vmatpush1.msra.mxu0 0.0
    %719 = vmatprep.subr.mxu0 0.0
    %720 = vmatpush1.msra.mxu0 0.0
    %721 = vmatprep.subr.mxu0 0.0
    %722 = vmatpush1.msra.mxu0 0.0
    %723 = vmatprep.subr.mxu0 0.0
    %724 = vmatpush1.msra.mxu0 0.0
    %725 = vmatprep.subr.mxu0 0.0
    %726 = vmatpush1.msra.mxu0 0.0
    %727 = vmatprep.subr.mxu0 0.0
    %728 = vmatpush1.msra.mxu0 0.0
    %729 = vmatprep.subr.mxu0 0.0
    %730 = vmatpush1.msra.mxu0 0.0
    %731 = vmatprep.subr.mxu0 0.0
    %732 = vmatpush1.msra.mxu0 0.0
    %733 = vmatprep.subr.mxu0 0.0
    %734 = vmatpush1.msra.mxu0 0.0
    %735 = vmatprep.subr.mxu0 0.0
    %736 = vmatpush1.msra.mxu0 0.0
    %737 = vmatprep.subr.mxu0 0.0
    %738 = vmatpush1.msra.mxu0 0.0
    %739 = vmatprep.subr.mxu0 0.0
    %740 = vmatpush1.msra.mxu0 0.0
    %741 = vmatprep.mubr.f32.mxu0 0.0
    %742 = vmatmul.mubr.f32.gmra.mrb[0].mxu0 %v535
    %v743 = vpop.f32.mrb[0].mxu0
    %v744 = vadd.f32 %v195, %v743
    %v745 = vpop.f32.mrb[0].mxu0
    %746 = vdwg.mxu0
    %s747 = scalar_lea.vmem %s0, 16
    %v748 = vld [vmem:[%s747] sm:$0xff]
    %v749 = vadd.f32 %v748, %v604
    %v750 = vxor.u32 %v749, 2147483648
    %v751 = vmul.f32 %v750, 1.442695
    %v752 = vpow.pop %v751
    %v753 = vadd.f32 %v752, 1.0
    %v754 = vrcp.pop %v753
    %v755 = vmul.f32 1.0, %v754
    %s756 = scalar_lea.vmem %s1, 16
    %v757 = vld [vmem:[%s756] sm:$0xff]
    %v758 = vadd.f32 %v757, %v674
    %v759 = vxor.u32 %v758, 2147483648
    %v760 = vmul.f32 %v759, 1.442695
    %v761 = vpow.pop %v760
    %v762 = vadd.f32 %v761, 1.0
    %v763 = vrcp.pop %v762
    %v764 = vmul.f32 1.0, %v763
    %s765 = scalar_lea.vmem %s2, 16
    %v766 = vld [vmem:[%s765] sm:$0xff]
    %v767 = vmul.f32 %v755, %v744
    %v768 = vadd.f32 %v766, %v767
    %v769 = vtanh.pop %v768
    %v770 = vsub.f32 1.0, %v764
    %v771 = vmul.f32 %v770, %v769
    %v772 = vmul.f32 %v764, %v531
    %v773 = vadd.f32 %v771, %v772
    %s774 = scalar_lea.vmem [#allocation2], 16
    %775 = vst.msk [vmem:[%s774] sm:$0xff] %vm47, %v773
    %v777 = vsel %vm47, %v773, 0
    %779 = vmatprep.subr.mxu0 0.0
    %780 = vmatpush1.msra.mxu0 %v33
    %781 = vmatprep.subr.mxu0 0.0
    %782 = vmatpush1.msra.mxu0 %v34
    %783 = vmatprep.subr.mxu0 0.0
    %784 = vmatpush1.msra.mxu0 %v35
    %785 = vmatprep.subr.mxu0 0.0
    %786 = vmatpush1.msra.mxu0 %v36
    %787 = vmatprep.subr.mxu0 0.0
    %788 = vmatpush1.msra.mxu0 0.0
    %789 = vmatprep.subr.mxu0 0.0
    %790 = vmatpush1.msra.mxu0 0.0
    %791 = vmatprep.subr.mxu0 0.0
    %792 = vmatpush1.msra.mxu0 0.0
    %793 = vmatprep.subr.mxu0 0.0
    %794 = vmatpush1.msra.mxu0 0.0
    %795 = vmatprep.subr.mxu0 0.0
    %796 = vmatpush1.msra.mxu0 0.0
    %797 = vmatprep.subr.mxu0 0.0
    %798 = vmatpush1.msra.mxu0 0.0
    %799 = vmatprep.subr.mxu0 0.0
    %800 = vmatpush1.msra.mxu0 0.0
    %801 = vmatprep.subr.mxu0 0.0
    %802 = vmatpush1.msra.mxu0 0.0
    %803 = vmatprep.subr.mxu0 0.0
    %804 = vmatpush1.msra.mxu0 0.0
    %805 = vmatprep.subr.mxu0 0.0
    %806 = vmatpush1.msra.mxu0 0.0
    %807 = vmatprep.subr.mxu0 0.0
    %808 = vmatpush1.msra.mxu0 0.0
    %809 = vmatprep.subr.mxu0 0.0
    %810 = vmatpush1.msra.mxu0 0.0
    %811 = vmatprep.subr.mxu0 0.0
    %812 = vmatpush1.msra.mxu0 0.0
    %813 = vmatprep.subr.mxu0 0.0
    %814 = vmatpush1.msra.mxu0 0.0
    %815 = vmatprep.subr.mxu0 0.0
    %816 = vmatpush1.msra.mxu0 0.0
    %817 = vmatprep.subr.mxu0 0.0
    %818 = vmatpush1.msra.mxu0 0.0
    %819 = vmatprep.subr.mxu0 0.0
    %820 = vmatpush1.msra.mxu0 0.0
    %821 = vmatprep.subr.mxu0 0.0
    %822 = vmatpush1.msra.mxu0 0.0
    %823 = vmatprep.subr.mxu0 0.0
    %824 = vmatpush1.msra.mxu0 0.0
    %825 = vmatprep.subr.mxu0 0.0
    %826 = vmatpush1.msra.mxu0 0.0
    %827 = vmatprep.subr.mxu0 0.0
    %828 = vmatpush1.msra.mxu0 0.0
    %829 = vmatprep.subr.mxu0 0.0
    %830 = vmatpush1.msra.mxu0 0.0
    %831 = vmatprep.subr.mxu0 0.0
    %832 = vmatpush1.msra.mxu0 0.0
    %833 = vmatprep.subr.mxu0 0.0
    %834 = vmatpush1.msra.mxu0 0.0
    %835 = vmatprep.subr.mxu0 0.0
    %836 = vmatpush1.msra.mxu0 0.0
    %837 = vmatprep.subr.mxu0 0.0
    %838 = vmatpush1.msra.mxu0 0.0
    %839 = vmatprep.subr.mxu0 0.0
    %840 = vmatpush1.msra.mxu0 0.0
    %841 = vmatprep.subr.mxu0 0.0
    %842 = vmatpush1.msra.mxu0 0.0
    %843 = vmatprep.mubr.f32.mxu0 0.0
    %844 = vmatmul.mubr.f32.gmra.mrb[0].mxu0 %v777
    %v845 = vpop.f32.mrb[0].mxu0
    %v846 = vadd.f32 0.0, %v845
    %v847 = vpop.f32.mrb[0].mxu0
    %848 = vdwg.mxu0
    %849 = vmatprep.subr.mxu0 0.0
    %850 = vmatpush1.msra.mxu0 %v37
    %851 = vmatprep.subr.mxu0 0.0
    %852 = vmatpush1.msra.mxu0 %v38
    %853 = vmatprep.subr.mxu0 0.0
    %854 = vmatpush1.msra.mxu0 %v39
    %855 = vmatprep.subr.mxu0 0.0
    %856 = vmatpush1.msra.mxu0 %v40
    %857 = vmatprep.subr.mxu0 0.0
    %858 = vmatpush1.msra.mxu0 0.0
    %859 = vmatprep.subr.mxu0 0.0
    %860 = vmatpush1.msra.mxu0 0.0
    %861 = vmatprep.subr.mxu0 0.0
    %862 = vmatpush1.msra.mxu0 0.0
    %863 = vmatprep.subr.mxu0 0.0
    %864 = vmatpush1.msra.mxu0 0.0
    %865 = vmatprep.subr.mxu0 0.0
    %866 = vmatpush1.msra.mxu0 0.0
    %867 = vmatprep.subr.mxu0 0.0
    %868 = vmatpush1.msra.mxu0 0.0
    %869 = vmatprep.subr.mxu0 0.0
    %870 = vmatpush1.msra.mxu0 0.0
    %871 = vmatprep.subr.mxu0 0.0
    %872 = vmatpush1.msra.mxu0 0.0
    %873 = vmatprep.subr.mxu0 0.0
    %874 = vmatpush1.msra.mxu0 0.0
    %875 = vmatprep.subr.mxu0 0.0
    %876 = vmatpush1.msra.mxu0 0.0
    %877 = vmatprep.subr.mxu0 0.0
    %878 = vmatpush1.msra.mxu0 0.0
    %879 = vmatprep.subr.mxu0 0.0
    %880 = vmatpush1.msra.mxu0 0.0
    %881 = vmatprep.subr.mxu0 0.0
    %882 = vmatpush1.msra.mxu0 0.0
    %883 = vmatprep.subr.mxu0 0.0
    %884 = vmatpush1.msra.mxu0 0.0
    %885 = vmatprep.subr.mxu0 0.0
    %886 = vmatpush1.msra.mxu0 0.0
    %887 = vmatprep.subr.mxu0 0.0
    %888 = vmatpush1.msra.mxu0 0.0
    %889 = vmatprep.subr.mxu0 0.0
    %890 = vmatpush1.msra.mxu0 0.0
    %891 = vmatprep.subr.mxu0 0.0
    %892 = vmatpush1.msra.mxu0 0.0
    %893 = vmatprep.subr.mxu0 0.0
    %894 = vmatpush1.msra.mxu0 0.0
    %895 = vmatprep.subr.mxu0 0.0
    %896 = vmatpush1.msra.mxu0 0.0
    %897 = vmatprep.subr.mxu0 0.0
    %898 = vmatpush1.msra.mxu0 0.0
    %899 = vmatprep.subr.mxu0 0.0
    %900 = vmatpush1.msra.mxu0 0.0
    %901 = vmatprep.subr.mxu0 0.0
    %902 = vmatpush1.msra.mxu0 0.0
    %903 = vmatprep.subr.mxu0 0.0
    %904 = vmatpush1.msra.mxu0 0.0
    %905 = vmatprep.subr.mxu0 0.0
    %906 = vmatpush1.msra.mxu0 0.0
    %907 = vmatprep.subr.mxu0 0.0
    %908 = vmatpush1.msra.mxu0 0.0
    %909 = vmatprep.subr.mxu0 0.0
    %910 = vmatpush1.msra.mxu0 0.0
    %911 = vmatprep.subr.mxu0 0.0
    %912 = vmatpush1.msra.mxu0 0.0
    %913 = vmatprep.mubr.f32.mxu0 0.0
    %914 = vmatmul.mubr.f32.gmra.mrb[0].mxu0 %v777
    %v915 = vpop.f32.mrb[0].mxu0
    %v916 = vadd.f32 0.0, %v915
    %v917 = vpop.f32.mrb[0].mxu0
    %918 = vdwg.mxu0
    %919 = vmatprep.subr.mxu0 0.0
    %920 = vmatpush1.msra.mxu0 %v41
    %921 = vmatprep.subr.mxu0 0.0
    %922 = vmatpush1.msra.mxu0 %v42
    %923 = vmatprep.subr.mxu0 0.0
    %924 = vmatpush1.msra.mxu0 %v43
    %925 = vmatprep.subr.mxu0 0.0
    %926 = vmatpush1.msra.mxu0 %v44
    %927 = vmatprep.subr.mxu0 0.0
    %928 = vmatpush1.msra.mxu0 0.0
    %929 = vmatprep.subr.mxu0 0.0
    %930 = vmatpush1.msra.mxu0 0.0
    %931 = vmatprep.subr.mxu0 0.0
    %932 = vmatpush1.msra.mxu0 0.0
    %933 = vmatprep.subr.mxu0 0.0
    %934 = vmatpush1.msra.mxu0 0.0
    %935 = vmatprep.subr.mxu0 0.0
    %936 = vmatpush1.msra.mxu0 0.0
    %937 = vmatprep.subr.mxu0 0.0
    %938 = vmatpush1.msra.mxu0 0.0
    %939 = vmatprep.subr.mxu0 0.0
    %940 = vmatpush1.msra.mxu0 0.0
    %941 = vmatprep.subr.mxu0 0.0
    %942 = vmatpush1.msra.mxu0 0.0
    %943 = vmatprep.subr.mxu0 0.0
    %944 = vmatpush1.msra.mxu0 0.0
    %945 = vmatprep.subr.mxu0 0.0
    %946 = vmatpush1.msra.mxu0 0.0
    %947 = vmatprep.subr.mxu0 0.0
    %948 = vmatpush1.msra.mxu0 0.0
    %949 = vmatprep.subr.mxu0 0.0
    %950 = vmatpush1.msra.mxu0 0.0
    %951 = vmatprep.subr.mxu0 0.0
    %952 = vmatpush1.msra.mxu0 0.0
    %953 = vmatprep.subr.mxu0 0.0
    %954 = vmatpush1.msra.mxu0 0.0
    %955 = vmatprep.subr.mxu0 0.0
    %956 = vmatpush1.msra.mxu0 0.0
    %957 = vmatprep.subr.mxu0 0.0
    %958 = vmatpush1.msra.mxu0 0.0
    %959 = vmatprep.subr.mxu0 0.0
    %960 = vmatpush1.msra.mxu0 0.0
    %961 = vmatprep.subr.mxu0 0.0
    %962 = vmatpush1.msra.mxu0 0.0
    %963 = vmatprep.subr.mxu0 0.0
    %964 = vmatpush1.msra.mxu0 0.0
    %965 = vmatprep.subr.mxu0 0.0
    %966 = vmatpush1.msra.mxu0 0.0
    %967 = vmatprep.subr.mxu0 0.0
    %968 = vmatpush1.msra.mxu0 0.0
    %969 = vmatprep.subr.mxu0 0.0
    %970 = vmatpush1.msra.mxu0 0.0
    %971 = vmatprep.subr.mxu0 0.0
    %972 = vmatpush1.msra.mxu0 0.0
    %973 = vmatprep.subr.mxu0 0.0
    %974 = vmatpush1.msra.mxu0 0.0
    %975 = vmatprep.subr.mxu0 0.0
    %976 = vmatpush1.msra.mxu0 0.0
    %977 = vmatprep.subr.mxu0 0.0
    %978 = vmatpush1.msra.mxu0 0.0
    %979 = vmatprep.subr.mxu0 0.0
    %980 = vmatpush1.msra.mxu0 0.0
    %981 = vmatprep.subr.mxu0 0.0
    %982 = vmatpush1.msra.mxu0 0.0
    %983 = vmatprep.mubr.f32.mxu0 0.0
    %984 = vmatmul.mubr.f32.gmra.mrb[0].mxu0 %v777
    %v985 = vpop.f32.mrb[0].mxu0
    %v986 = vadd.f32 %v195, %v985
    %v987 = vpop.f32.mrb[0].mxu0
    %988 = vdwg.mxu0
    %s989 = scalar_lea.vmem %s0, 24
    %v990 = vld [vmem:[%s989] sm:$0xff]
    %v991 = vadd.f32 %v990, %v846
    %v992 = vxor.u32 %v991, 2147483648
    %v993 = vmul.f32 %v992, 1.442695
    %v994 = vpow.pop %v993
    %v995 = vadd.f32 %v994, 1.0
    %v996 = vrcp.pop %v995
    %v997 = vmul.f32 1.0, %v996
    %s998 = scalar_lea.vmem %s1, 24
    %v999 = vld [vmem:[%s998] sm:$0xff]
    %v1000 = vadd.f32 %v999, %v916
    %v1001 = vxor.u32 %v1000, 2147483648
    %v1002 = vmul.f32 %v1001, 1.442695
    %v1003 = vpow.pop %v1002
    %v1004 = vadd.f32 %v1003, 1.0
    %v1005 = vrcp.pop %v1004
    %v1006 = vmul.f32 1.0, %v1005
    %s1007 = scalar_lea.vmem %s2, 24
    %v1008 = vld [vmem:[%s1007] sm:$0xff]
    %v1009 = vmul.f32 %v997, %v986
    %v1010 = vadd.f32 %v1008, %v1009
    %v1011 = vtanh.pop %v1010
    %v1012 = vsub.f32 1.0, %v1006
    %v1013 = vmul.f32 %v1012, %v1011
    %v1014 = vmul.f32 %v1006, %v773
    %v1015 = vadd.f32 %v1013, %v1014
    %s1016 = scalar_lea.vmem [#allocation2], 24
    %1017 = vst.msk [vmem:[%s1016] sm:$0xff] %vm47, %v1015
    %v1019 = vsel %vm47, %v1015, 0
    %1021 = vmatprep.subr.mxu0 0.0
    %1022 = vmatpush1.msra.mxu0 %v33
    %1023 = vmatprep.subr.mxu0 0.0
    %1024 = vmatpush1.msra.mxu0 %v34
    %1025 = vmatprep.subr.mxu0 0.0
    %1026 = vmatpush1.msra.mxu0 %v35
    %1027 = vmatprep.subr.mxu0 0.0
    %1028 = vmatpush1.msra.mxu0 %v36
    %1029 = vmatprep.subr.mxu0 0.0
    %1030 = vmatpush1.msra.mxu0 0.0
    %1031 = vmatprep.subr.mxu0 0.0
    %1032 = vmatpush1.msra.mxu0 0.0
    %1033 = vmatprep.subr.mxu0 0.0
    %1034 = vmatpush1.msra.mxu0 0.0
    %1035 = vmatprep.subr.mxu0 0.0
    %1036 = vmatpush1.msra.mxu0 0.0
    %1037 = vmatprep.subr.mxu0 0.0
    %1038 = vmatpush1.msra.mxu0 0.0
    %1039 = vmatprep.subr.mxu0 0.0
    %1040 = vmatpush1.msra.mxu0 0.0
    %1041 = vmatprep.subr.mxu0 0.0
    %1042 = vmatpush1.msra.mxu0 0.0
    %1043 = vmatprep.subr.mxu0 0.0
    %1044 = vmatpush1.msra.mxu0 0.0
    %1045 = vmatprep.subr.mxu0 0.0
    %1046 = vmatpush1.msra.mxu0 0.0
    %1047 = vmatprep.subr.mxu0 0.0
    %1048 = vmatpush1.msra.mxu0 0.0
    %1049 = vmatprep.subr.mxu0 0.0
    %1050 = vmatpush1.msra.mxu0 0.0
    %1051 = vmatprep.subr.mxu0 0.0
    %1052 = vmatpush1.msra.mxu0 0.0
    %1053 = vmatprep.subr.mxu0 0.0
    %1054 = vmatpush1.msra.mxu0 0.0
    %1055 = vmatprep.subr.mxu0 0.0
    %1056 = vmatpush1.msra.mxu0 0.0
    %1057 = vmatprep.subr.mxu0 0.0
    %1058 = vmatpush1.msra.mxu0 0.0
    %1059 = vmatprep.subr.mxu0 0.0
    %1060 = vmatpush1.msra.mxu0 0.0
    %1061 = vmatprep.subr.mxu0 0.0
    %1062 = vmatpush1.msra.mxu0 0.0
    %1063 = vmatprep.subr.mxu0 0.0
    %1064 = vmatpush1.msra.mxu0 0.0
    %1065 = vmatprep.subr.mxu0 0.0
    %1066 = vmatpush1.msra.mxu0 0.0
    %1067 = vmatprep.subr.mxu0 0.0
    %1068 = vmatpush1.msra.mxu0 0.0
    %1069 = vmatprep.subr.mxu0 0.0
    %1070 = vmatpush1.msra.mxu0 0.0
    %1071 = vmatprep.subr.mxu0 0.0
    %1072 = vmatpush1.msra.mxu0 0.0
    %1073 = vmatprep.subr.mxu0 0.0
    %1074 = vmatpush1.msra.mxu0 0.0
    %1075 = vmatprep.subr.mxu0 0.0
    %1076 = vmatpush1.msra.mxu0 0.0
    %1077 = vmatprep.subr.mxu0 0.0
    %1078 = vmatpush1.msra.mxu0 0.0
    %1079 = vmatprep.subr.mxu0 0.0
    %1080 = vmatpush1.msra.mxu0 0.0
    %1081 = vmatprep.subr.mxu0 0.0
    %1082 = vmatpush1.msra.mxu0 0.0
    %1083 = vmatprep.subr.mxu0 0.0
    %1084 = vmatpush1.msra.mxu0 0.0
    %1085 = vmatprep.mubr.f32.mxu0 0.0
    %1086 = vmatmul.mubr.f32.gmra.mrb[0].mxu0 %v1019
    %v1087 = vpop.f32.mrb[0].mxu0
    %v1088 = vadd.f32 0.0, %v1087
    %v1089 = vpop.f32.mrb[0].mxu0
    %1090 = vdwg.mxu0
    %1091 = vmatprep.subr.mxu0 0.0
    %1092 = vmatpush1.msra.mxu0 %v37
    %1093 = vmatprep.subr.mxu0 0.0
    %1094 = vmatpush1.msra.mxu0 %v38
    %1095 = vmatprep.subr.mxu0 0.0
    %1096 = vmatpush1.msra.mxu0 %v39
    %1097 = vmatprep.subr.mxu0 0.0
    %1098 = vmatpush1.msra.mxu0 %v40
    %1099 = vmatprep.subr.mxu0 0.0
    %1100 = vmatpush1.msra.mxu0 0.0
    %1101 = vmatprep.subr.mxu0 0.0
    %1102 = vmatpush1.msra.mxu0 0.0
    %1103 = vmatprep.subr.mxu0 0.0
    %1104 = vmatpush1.msra.mxu0 0.0
    %1105 = vmatprep.subr.mxu0 0.0
    %1106 = vmatpush1.msra.mxu0 0.0
    %1107 = vmatprep.subr.mxu0 0.0
    %1108 = vmatpush1.msra.mxu0 0.0
    %1109 = vmatprep.subr.mxu0 0.0
    %1110 = vmatpush1.msra.mxu0 0.0
    %1111 = vmatprep.subr.mxu0 0.0
    %1112 = vmatpush1.msra.mxu0 0.0
    %1113 = vmatprep.subr.mxu0 0.0
    %1114 = vmatpush1.msra.mxu0 0.0
    %1115 = vmatprep.subr.mxu0 0.0
    %1116 = vmatpush1.msra.mxu0 0.0
    %1117 = vmatprep.subr.mxu0 0.0
    %1118 = vmatpush1.msra.mxu0 0.0
    %1119 = vmatprep.subr.mxu0 0.0
    %1120 = vmatpush1.msra.mxu0 0.0
    %1121 = vmatprep.subr.mxu0 0.0
    %1122 = vmatpush1.msra.mxu0 0.0
    %1123 = vmatprep.subr.mxu0 0.0
    %1124 = vmatpush1.msra.mxu0 0.0
    %1125 = vmatprep.subr.mxu0 0.0
    %1126 = vmatpush1.msra.mxu0 0.0
    %1127 = vmatprep.subr.mxu0 0.0
    %1128 = vmatpush1.msra.mxu0 0.0
    %1129 = vmatprep.subr.mxu0 0.0
    %1130 = vmatpush1.msra.mxu0 0.0
    %1131 = vmatprep.subr.mxu0 0.0
    %1132 = vmatpush1.msra.mxu0 0.0
    %1133 = vmatprep.subr.mxu0 0.0
    %1134 = vmatpush1.msra.mxu0 0.0
    %1135 = vmatprep.subr.mxu0 0.0
    %1136 = vmatpush1.msra.mxu0 0.0
    %1137 = vmatprep.subr.mxu0 0.0
    %1138 = vmatpush1.msra.mxu0 0.0
    %1139 = vmatprep.subr.mxu0 0.0
    %1140 = vmatpush1.msra.mxu0 0.0
    %1141 = vmatprep.subr.mxu0 0.0
    %1142 = vmatpush1.msra.mxu0 0.0
    %1143 = vmatprep.subr.mxu0 0.0
    %1144 = vmatpush1.msra.mxu0 0.0
    %1145 = vmatprep.subr.mxu0 0.0
    %1146 = vmatpush1.msra.mxu0 0.0
    %1147 = vmatprep.subr.mxu0 0.0
    %1148 = vmatpush1.msra.mxu0 0.0
    %1149 = vmatprep.subr.mxu0 0.0
    %1150 = vmatpush1.msra.mxu0 0.0
    %1151 = vmatprep.subr.mxu0 0.0
    %1152 = vmatpush1.msra.mxu0 0.0
    %1153 = vmatprep.subr.mxu0 0.0
    %1154 = vmatpush1.msra.mxu0 0.0
    %1155 = vmatprep.mubr.f32.mxu0 0.0
    %1156 = vmatmul.mubr.f32.gmra.mrb[0].mxu0 %v1019
    %v1157 = vpop.f32.mrb[0].mxu0
    %v1158 = vadd.f32 0.0, %v1157
    %v1159 = vpop.f32.mrb[0].mxu0
    %1160 = vdwg.mxu0
    %1161 = vmatprep.subr.mxu0 0.0
    %1162 = vmatpush1.msra.mxu0 %v41
    %1163 = vmatprep.subr.mxu0 0.0
    %1164 = vmatpush1.msra.mxu0 %v42
    %1165 = vmatprep.subr.mxu0 0.0
    %1166 = vmatpush1.msra.mxu0 %v43
    %1167 = vmatprep.subr.mxu0 0.0
    %1168 = vmatpush1.msra.mxu0 %v44
    %1169 = vmatprep.subr.mxu0 0.0
    %1170 = vmatpush1.msra.mxu0 0.0
    %1171 = vmatprep.subr.mxu0 0.0
    %1172 = vmatpush1.msra.mxu0 0.0
    %1173 = vmatprep.subr.mxu0 0.0
    %1174 = vmatpush1.msra.mxu0 0.0
    %1175 = vmatprep.subr.mxu0 0.0
    %1176 = vmatpush1.msra.mxu0 0.0
    %1177 = vmatprep.subr.mxu0 0.0
    %1178 = vmatpush1.msra.mxu0 0.0
    %1179 = vmatprep.subr.mxu0 0.0
    %1180 = vmatpush1.msra.mxu0 0.0
    %1181 = vmatprep.subr.mxu0 0.0
    %1182 = vmatpush1.msra.mxu0 0.0
    %1183 = vmatprep.subr.mxu0 0.0
    %1184 = vmatpush1.msra.mxu0 0.0
    %1185 = vmatprep.subr.mxu0 0.0
    %1186 = vmatpush1.msra.mxu0 0.0
    %1187 = vmatprep.subr.mxu0 0.0
    %1188 = vmatpush1.msra.mxu0 0.0
    %1189 = vmatprep.subr.mxu0 0.0
    %1190 = vmatpush1.msra.mxu0 0.0
    %1191 = vmatprep.subr.mxu0 0.0
    %1192 = vmatpush1.msra.mxu0 0.0
    %1193 = vmatprep.subr.mxu0 0.0
    %1194 = vmatpush1.msra.mxu0 0.0
    %1195 = vmatprep.subr.mxu0 0.0
    %1196 = vmatpush1.msra.mxu0 0.0
    %1197 = vmatprep.subr.mxu0 0.0
    %1198 = vmatpush1.msra.mxu0 0.0
    %1199 = vmatprep.subr.mxu0 0.0
    %1200 = vmatpush1.msra.mxu0 0.0
    %1201 = vmatprep.subr.mxu0 0.0
    %1202 = vmatpush1.msra.mxu0 0.0
    %1203 = vmatprep.subr.mxu0 0.0
    %1204 = vmatpush1.msra.mxu0 0.0
    %1205 = vmatprep.subr.mxu0 0.0
    %1206 = vmatpush1.msra.mxu0 0.0
    %1207 = vmatprep.subr.mxu0 0.0
    %1208 = vmatpush1.msra.mxu0 0.0
    %1209 = vmatprep.subr.mxu0 0.0
    %1210 = vmatpush1.msra.mxu0 0.0
    %1211 = vmatprep.subr.mxu0 0.0
    %1212 = vmatpush1.msra.mxu0 0.0
    %1213 = vmatprep.subr.mxu0 0.0
    %1214 = vmatpush1.msra.mxu0 0.0
    %1215 = vmatprep.subr.mxu0 0.0
    %1216 = vmatpush1.msra.mxu0 0.0
    %1217 = vmatprep.subr.mxu0 0.0
    %1218 = vmatpush1.msra.mxu0 0.0
    %1219 = vmatprep.subr.mxu0 0.0
    %1220 = vmatpush1.msra.mxu0 0.0
    %1221 = vmatprep.subr.mxu0 0.0
    %1222 = vmatpush1.msra.mxu0 0.0
    %1223 = vmatprep.subr.mxu0 0.0
    %1224 = vmatpush1.msra.mxu0 0.0
    %1225 = vmatprep.mubr.f32.mxu0 0.0
    %1226 = vmatmul.mubr.f32.gmra.mrb[0].mxu0 %v1019
    %v1227 = vpop.f32.mrb[0].mxu0
    %v1228 = vadd.f32 %v195, %v1227
    %v1229 = vpop.f32.mrb[0].mxu0
    %1230 = vdwg.mxu0
    %s1231 = scalar_lea.vmem %s0, 32
    %v1232 = vld [vmem:[%s1231] sm:$0xff]
    %v1233 = vadd.f32 %v1232, %v1088
    %v1234 = vxor.u32 %v1233, 2147483648
    %v1235 = vmul.f32 %v1234, 1.442695
    %v1236 = vpow.pop %v1235
    %v1237 = vadd.f32 %v1236, 1.0
    %v1238 = vrcp.pop %v1237
    %v1239 = vmul.f32 1.0, %v1238
    %s1240 = scalar_lea.vmem %s1, 32
    %v1241 = vld [vmem:[%s1240] sm:$0xff]
    %v1242 = vadd.f32 %v1241, %v1158
    %v1243 = vxor.u32 %v1242, 2147483648
    %v1244 = vmul.f32 %v1243, 1.442695
    %v1245 = vpow.pop %v1244
    %v1246 = vadd.f32 %v1245, 1.0
    %v1247 = vrcp.pop %v1246
    %v1248 = vmul.f32 1.0, %v1247
    %s1249 = scalar_lea.vmem %s2, 32
    %v1250 = vld [vmem:[%s1249] sm:$0xff]
    %v1251 = vmul.f32 %v1239, %v1228
    %v1252 = vadd.f32 %v1250, %v1251
    %v1253 = vtanh.pop %v1252
    %v1254 = vsub.f32 1.0, %v1248
    %v1255 = vmul.f32 %v1254, %v1253
    %v1256 = vmul.f32 %v1248, %v1015
    %v1257 = vadd.f32 %v1255, %v1256
    %s1258 = scalar_lea.vmem [#allocation2], 32
    %1259 = vst.msk [vmem:[%s1258] sm:$0xff] %vm47, %v1257
    %v1261 = vsel %vm47, %v1257, 0
    %1263 = vmatprep.subr.mxu0 0.0
    %1264 = vmatpush1.msra.mxu0 %v33
    %1265 = vmatprep.subr.mxu0 0.0
    %1266 = vmatpush1.msra.mxu0 %v34
    %1267 = vmatprep.subr.mxu0 0.0
    %1268 = vmatpush1.msra.mxu0 %v35
    %1269 = vmatprep.subr.mxu0 0.0
    %1270 = vmatpush1.msra.mxu0 %v36
    %1271 = vmatprep.subr.mxu0 0.0
    %1272 = vmatpush1.msra.mxu0 0.0
    %1273 = vmatprep.subr.mxu0 0.0
    %1274 = vmatpush1.msra.mxu0 0.0
    %1275 = vmatprep.subr.mxu0 0.0
    %1276 = vmatpush1.msra.mxu0 0.0
    %1277 = vmatprep.subr.mxu0 0.0
    %1278 = vmatpush1.msra.mxu0 0.0
    %1279 = vmatprep.subr.mxu0 0.0
    %1280 = vmatpush1.msra.mxu0 0.0
    %1281 = vmatprep.subr.mxu0 0.0
    %1282 = vmatpush1.msra.mxu0 0.0
    %1283 = vmatprep.subr.mxu0 0.0
    %1284 = vmatpush1.msra.mxu0 0.0
    %1285 = vmatprep.subr.mxu0 0.0
    %1286 = vmatpush1.msra.mxu0 0.0
    %1287 = vmatprep.subr.mxu0 0.0
    %1288 = vmatpush1.msra.mxu0 0.0
    %1289 = vmatprep.subr.mxu0 0.0
    %1290 = vmatpush1.msra.mxu0 0.0
    %1291 = vmatprep.subr.mxu0 0.0
    %1292 = vmatpush1.msra.mxu0 0.0
    %1293 = vmatprep.subr.mxu0 0.0
    %1294 = vmatpush1.msra.mxu0 0.0
    %1295 = vmatprep.subr.mxu0 0.0
    %1296 = vmatpush1.msra.mxu0 0.0
    %1297 = vmatprep.subr.mxu0 0.0
    %1298 = vmatpush1.msra.mxu0 0.0
    %1299 = vmatprep.subr.mxu0 0.0
    %1300 = vmatpush1.msra.mxu0 0.0
    %1301 = vmatprep.subr.mxu0 0.0
    %1302 = vmatpush1.msra.mxu0 0.0
    %1303 = vmatprep.subr.mxu0 0.0
    %1304 = vmatpush1.msra.mxu0 0.0
    %1305 = vmatprep.subr.mxu0 0.0
    %1306 = vmatpush1.msra.mxu0 0.0
    %1307 = vmatprep.subr.mxu0 0.0
    %1308 = vmatpush1.msra.mxu0 0.0
    %1309 = vmatprep.subr.mxu0 0.0
    %1310 = vmatpush1.msra.mxu0 0.0
    %1311 = vmatprep.subr.mxu0 0.0
    %1312 = vmatpush1.msra.mxu0 0.0
    %1313 = vmatprep.subr.mxu0 0.0
    %1314 = vmatpush1.msra.mxu0 0.0
    %1315 = vmatprep.subr.mxu0 0.0
    %1316 = vmatpush1.msra.mxu0 0.0
    %1317 = vmatprep.subr.mxu0 0.0
    %1318 = vmatpush1.msra.mxu0 0.0
    %1319 = vmatprep.subr.mxu0 0.0
    %1320 = vmatpush1.msra.mxu0 0.0
    %1321 = vmatprep.subr.mxu0 0.0
    %1322 = vmatpush1.msra.mxu0 0.0
    %1323 = vmatprep.subr.mxu0 0.0
    %1324 = vmatpush1.msra.mxu0 0.0
    %1325 = vmatprep.subr.mxu0 0.0
    %1326 = vmatpush1.msra.mxu0 0.0
    %1327 = vmatprep.mubr.f32.mxu0 0.0
    %1328 = vmatmul.mubr.f32.gmra.mrb[0].mxu0 %v1261
    %v1329 = vpop.f32.mrb[0].mxu0
    %v1330 = vadd.f32 0.0, %v1329
    %v1331 = vpop.f32.mrb[0].mxu0
    %1332 = vdwg.mxu0
    %1333 = vmatprep.subr.mxu0 0.0
    %1334 = vmatpush1.msra.mxu0 %v37
    %1335 = vmatprep.subr.mxu0 0.0
    %1336 = vmatpush1.msra.mxu0 %v38
    %1337 = vmatprep.subr.mxu0 0.0
    %1338 = vmatpush1.msra.mxu0 %v39
    %1339 = vmatprep.subr.mxu0 0.0
    %1340 = vmatpush1.msra.mxu0 %v40
    %1341 = vmatprep.subr.mxu0 0.0
    %1342 = vmatpush1.msra.mxu0 0.0
    %1343 = vmatprep.subr.mxu0 0.0
    %1344 = vmatpush1.msra.mxu0 0.0
    %1345 = vmatprep.subr.mxu0 0.0
    %1346 = vmatpush1.msra.mxu0 0.0
    %1347 = vmatprep.subr.mxu0 0.0
    %1348 = vmatpush1.msra.mxu0 0.0
    %1349 = vmatprep.subr.mxu0 0.0
    %1350 = vmatpush1.msra.mxu0 0.0
    %1351 = vmatprep.subr.mxu0 0.0
    %1352 = vmatpush1.msra.mxu0 0.0
    %1353 = vmatprep.subr.mxu0 0.0
    %1354 = vmatpush1.msra.mxu0 0.0
    %1355 = vmatprep.subr.mxu0 0.0
    %1356 = vmatpush1.msra.mxu0 0.0
    %1357 = vmatprep.subr.mxu0 0.0
    %1358 = vmatpush1.msra.mxu0 0.0
    %1359 = vmatprep.subr.mxu0 0.0
    %1360 = vmatpush1.msra.mxu0 0.0
    %1361 = vmatprep.subr.mxu0 0.0
    %1362 = vmatpush1.msra.mxu0 0.0
    %1363 = vmatprep.subr.mxu0 0.0
    %1364 = vmatpush1.msra.mxu0 0.0
    %1365 = vmatprep.subr.mxu0 0.0
    %1366 = vmatpush1.msra.mxu0 0.0
    %1367 = vmatprep.subr.mxu0 0.0
    %1368 = vmatpush1.msra.mxu0 0.0
    %1369 = vmatprep.subr.mxu0 0.0
    %1370 = vmatpush1.msra.mxu0 0.0
    %1371 = vmatprep.subr.mxu0 0.0
    %1372 = vmatpush1.msra.mxu0 0.0
    %1373 = vmatprep.subr.mxu0 0.0
    %1374 = vmatpush1.msra.mxu0 0.0
    %1375 = vmatprep.subr.mxu0 0.0
    %1376 = vmatpush1.msra.mxu0 0.0
    %1377 = vmatprep.subr.mxu0 0.0
    %1378 = vmatpush1.msra.mxu0 0.0
    %1379 = vmatprep.subr.mxu0 0.0
    %1380 = vmatpush1.msra.mxu0 0.0
    %1381 = vmatprep.subr.mxu0 0.0
    %1382 = vmatpush1.msra.mxu0 0.0
    %1383 = vmatprep.subr.mxu0 0.0
    %1384 = vmatpush1.msra.mxu0 0.0
    %1385 = vmatprep.subr.mxu0 0.0
    %1386 = vmatpush1.msra.mxu0 0.0
    %1387 = vmatprep.subr.mxu0 0.0
    %1388 = vmatpush1.msra.mxu0 0.0
    %1389 = vmatprep.subr.mxu0 0.0
    %1390 = vmatpush1.msra.mxu0 0.0
    %1391 = vmatprep.subr.mxu0 0.0
    %1392 = vmatpush1.msra.mxu0 0.0
    %1393 = vmatprep.subr.mxu0 0.0
    %1394 = vmatpush1.msra.mxu0 0.0
    %1395 = vmatprep.subr.mxu0 0.0
    %1396 = vmatpush1.msra.mxu0 0.0
    %1397 = vmatprep.mubr.f32.mxu0 0.0
    %1398 = vmatmul.mubr.f32.gmra.mrb[0].mxu0 %v1261
    %v1399 = vpop.f32.mrb[0].mxu0
    %v1400 = vadd.f32 0.0, %v1399
    %v1401 = vpop.f32.mrb[0].mxu0
    %1402 = vdwg.mxu0
    %1403 = vmatprep.subr.mxu0 0.0
    %1404 = vmatpush1.msra.mxu0 %v41
    %1405 = vmatprep.subr.mxu0 0.0
    %1406 = vmatpush1.msra.mxu0 %v42
    %1407 = vmatprep.subr.mxu0 0.0
    %1408 = vmatpush1.msra.mxu0 %v43
    %1409 = vmatprep.subr.mxu0 0.0
    %1410 = vmatpush1.msra.mxu0 %v44
    %1411 = vmatprep.subr.mxu0 0.0
    %1412 = vmatpush1.msra.mxu0 0.0
    %1413 = vmatprep.subr.mxu0 0.0
    %1414 = vmatpush1.msra.mxu0 0.0
    %1415 = vmatprep.subr.mxu0 0.0
    %1416 = vmatpush1.msra.mxu0 0.0
    %1417 = vmatprep.subr.mxu0 0.0
    %1418 = vmatpush1.msra.mxu0 0.0
    %1419 = vmatprep.subr.mxu0 0.0
    %1420 = vmatpush1.msra.mxu0 0.0
    %1421 = vmatprep.subr.mxu0 0.0
    %1422 = vmatpush1.msra.mxu0 0.0
    %1423 = vmatprep.subr.mxu0 0.0
    %1424 = vmatpush1.msra.mxu0 0.0
    %1425 = vmatprep.subr.mxu0 0.0
    %1426 = vmatpush1.msra.mxu0 0.0
    %1427 = vmatprep.subr.mxu0 0.0
    %1428 = vmatpush1.msra.mxu0 0.0
    %1429 = vmatprep.subr.mxu0 0.0
    %1430 = vmatpush1.msra.mxu0 0.0
    %1431 = vmatprep.subr.mxu0 0.0
    %1432 = vmatpush1.msra.mxu0 0.0
    %1433 = vmatprep.subr.mxu0 0.0
    %1434 = vmatpush1.msra.mxu0 0.0
    %1435 = vmatprep.subr.mxu0 0.0
    %1436 = vmatpush1.msra.mxu0 0.0
    %1437 = vmatprep.subr.mxu0 0.0
    %1438 = vmatpush1.msra.mxu0 0.0
    %1439 = vmatprep.subr.mxu0 0.0
    %1440 = vmatpush1.msra.mxu0 0.0
    %1441 = vmatprep.subr.mxu0 0.0
    %1442 = vmatpush1.msra.mxu0 0.0
    %1443 = vmatprep.subr.mxu0 0.0
    %1444 = vmatpush1.msra.mxu0 0.0
    %1445 = vmatprep.subr.mxu0 0.0
    %1446 = vmatpush1.msra.mxu0 0.0
    %1447 = vmatprep.subr.mxu0 0.0
    %1448 = vmatpush1.msra.mxu0 0.0
    %1449 = vmatprep.subr.mxu0 0.0
    %1450 = vmatpush1.msra.mxu0 0.0
    %1451 = vmatprep.subr.mxu0 0.0
    %1452 = vmatpush1.msra.mxu0 0.0
    %1453 = vmatprep.subr.mxu0 0.0
    %1454 = vmatpush1.msra.mxu0 0.0
    %1455 = vmatprep.subr.mxu0 0.0
    %1456 = vmatpush1.msra.mxu0 0.0
    %1457 = vmatprep.subr.mxu0 0.0
    %1458 = vmatpush1.msra.mxu0 0.0
    %1459 = vmatprep.subr.mxu0 0.0
    %1460 = vmatpush1.msra.mxu0 0.0
    %1461 = vmatprep.subr.mxu0 0.0
    %1462 = vmatpush1.msra.mxu0 0.0
    %1463 = vmatprep.subr.mxu0 0.0
    %1464 = vmatpush1.msra.mxu0 0.0
    %1465 = vmatprep.subr.mxu0 0.0
    %1466 = vmatpush1.msra.mxu0 0.0
    %1467 = vmatprep.mubr.f32.mxu0 0.0
    %1468 = vmatmul.mubr.f32.gmra.mrb[0].mxu0 %v1261
    %v1469 = vpop.f32.mrb[0].mxu0
    %v1470 = vadd.f32 %v195, %v1469
    %v1471 = vpop.f32.mrb[0].mxu0
    %1472 = vdwg.mxu0
    %s1473 = scalar_lea.vmem %s0, 40
    %v1474 = vld [vmem:[%s1473] sm:$0xff]
    %v1475 = vadd.f32 %v1474, %v1330
    %v1476 = vxor.u32 %v1475, 2147483648
    %v1477 = vmul.f32 %v1476, 1.442695
    %v1478 = vpow.pop %v1477
    %v1479 = vadd.f32 %v1478, 1.0
    %v1480 = vrcp.pop %v1479
    %v1481 = vmul.f32 1.0, %v1480
    %s1482 = scalar_lea.vmem %s1, 40
    %v1483 = vld [vmem:[%s1482] sm:$0xff]
    %v1484 = vadd.f32 %v1483, %v1400
    %v1485 = vxor.u32 %v1484, 2147483648
    %v1486 = vmul.f32 %v1485, 1.442695
    %v1487 = vpow.pop %v1486
    %v1488 = vadd.f32 %v1487, 1.0
    %v1489 = vrcp.pop %v1488
    %v1490 = vmul.f32 1.0, %v1489
    %s1491 = scalar_lea.vmem %s2, 40
    %v1492 = vld [vmem:[%s1491] sm:$0xff]
    %v1493 = vmul.f32 %v1481, %v1470
    %v1494 = vadd.f32 %v1492, %v1493
    %v1495 = vtanh.pop %v1494
    %v1496 = vsub.f32 1.0, %v1490
    %v1497 = vmul.f32 %v1496, %v1495
    %v1498 = vmul.f32 %v1490, %v1257
    %v1499 = vadd.f32 %v1497, %v1498
    %s1500 = scalar_lea.vmem [#allocation2], 40
    %1501 = vst.msk [vmem:[%s1500] sm:$0xff] %vm47, %v1499
    %v1503 = vsel %vm47, %v1499, 0
    %1505 = vmatprep.subr.mxu0 0.0
    %1506 = vmatpush1.msra.mxu0 %v33
    %1507 = vmatprep.subr.mxu0 0.0
    %1508 = vmatpush1.msra.mxu0 %v34
    %1509 = vmatprep.subr.mxu0 0.0
    %1510 = vmatpush1.msra.mxu0 %v35
    %1511 = vmatprep.subr.mxu0 0.0
    %1512 = vmatpush1.msra.mxu0 %v36
    %1513 = vmatprep.subr.mxu0 0.0
    %1514 = vmatpush1.msra.mxu0 0.0
    %1515 = vmatprep.subr.mxu0 0.0
    %1516 = vmatpush1.msra.mxu0 0.0
    %1517 = vmatprep.subr.mxu0 0.0
    %1518 = vmatpush1.msra.mxu0 0.0
    %1519 = vmatprep.subr.mxu0 0.0
    %1520 = vmatpush1.msra.mxu0 0.0
    %1521 = vmatprep.subr.mxu0 0.0
    %1522 = vmatpush1.msra.mxu0 0.0
    %1523 = vmatprep.subr.mxu0 0.0
    %1524 = vmatpush1.msra.mxu0 0.0
    %1525 = vmatprep.subr.mxu0 0.0
    %1526 = vmatpush1.msra.mxu0 0.0
    %1527 = vmatprep.subr.mxu0 0.0
    %1528 = vmatpush1.msra.mxu0 0.0
    %1529 = vmatprep.subr.mxu0 0.0
    %1530 = vmatpush1.msra.mxu0 0.0
    %1531 = vmatprep.subr.mxu0 0.0
    %1532 = vmatpush1.msra.mxu0 0.0
    %1533 = vmatprep.subr.mxu0 0.0
    %1534 = vmatpush1.msra.mxu0 0.0
    %1535 = vmatprep.subr.mxu0 0.0
    %1536 = vmatpush1.msra.mxu0 0.0
    %1537 = vmatprep.subr.mxu0 0.0
    %1538 = vmatpush1.msra.mxu0 0.0
    %1539 = vmatprep.subr.mxu0 0.0
    %1540 = vmatpush1.msra.mxu0 0.0
    %1541 = vmatprep.subr.mxu0 0.0
    %1542 = vmatpush1.msra.mxu0 0.0
    %1543 = vmatprep.subr.mxu0 0.0
    %1544 = vmatpush1.msra.mxu0 0.0
    %1545 = vmatprep.subr.mxu0 0.0
    %1546 = vmatpush1.msra.mxu0 0.0
    %1547 = vmatprep.subr.mxu0 0.0
    %1548 = vmatpush1.msra.mxu0 0.0
    %1549 = vmatprep.subr.mxu0 0.0
    %1550 = vmatpush1.msra.mxu0 0.0
    %1551 = vmatprep.subr.mxu0 0.0
    %1552 = vmatpush1.msra.mxu0 0.0
    %1553 = vmatprep.subr.mxu0 0.0
    %1554 = vmatpush1.msra.mxu0 0.0
    %1555 = vmatprep.subr.mxu0 0.0
    %1556 = vmatpush1.msra.mxu0 0.0
    %1557 = vmatprep.subr.mxu0 0.0
    %1558 = vmatpush1.msra.mxu0 0.0
    %1559 = vmatprep.subr.mxu0 0.0
    %1560 = vmatpush1.msra.mxu0 0.0
    %1561 = vmatprep.subr.mxu0 0.0
    %1562 = vmatpush1.msra.mxu0 0.0
    %1563 = vmatprep.subr.mxu0 0.0
    %1564 = vmatpush1.msra.mxu0 0.0
    %1565 = vmatprep.subr.mxu0 0.0
    %1566 = vmatpush1.msra.mxu0 0.0
    %1567 = vmatprep.subr.mxu0 0.0
    %1568 = vmatpush1.msra.mxu0 0.0
    %1569 = vmatprep.mubr.f32.mxu0 0.0
    %1570 = vmatmul.mubr.f32.gmra.mrb[0].mxu0 %v1503
    %v1571 = vpop.f32.mrb[0].mxu0
    %v1572 = vadd.f32 0.0, %v1571
    %v1573 = vpop.f32.mrb[0].mxu0
    %1574 = vdwg.mxu0
    %1575 = vmatprep.subr.mxu0 0.0
    %1576 = vmatpush1.msra.mxu0 %v37
    %1577 = vmatprep.subr.mxu0 0.0
    %1578 = vmatpush1.msra.mxu0 %v38
    %1579 = vmatprep.subr.mxu0 0.0
    %1580 = vmatpush1.msra.mxu0 %v39
    %1581 = vmatprep.subr.mxu0 0.0
    %1582 = vmatpush1.msra.mxu0 %v40
    %1583 = vmatprep.subr.mxu0 0.0
    %1584 = vmatpush1.msra.mxu0 0.0
    %1585 = vmatprep.subr.mxu0 0.0
    %1586 = vmatpush1.msra.mxu0 0.0
    %1587 = vmatprep.subr.mxu0 0.0
    %1588 = vmatpush1.msra.mxu0 0.0
    %1589 = vmatprep.subr.mxu0 0.0
    %1590 = vmatpush1.msra.mxu0 0.0
    %1591 = vmatprep.subr.mxu0 0.0
    %1592 = vmatpush1.msra.mxu0 0.0
    %1593 = vmatprep.subr.mxu0 0.0
    %1594 = vmatpush1.msra.mxu0 0.0
    %1595 = vmatprep.subr.mxu0 0.0
    %1596 = vmatpush1.msra.mxu0 0.0
    %1597 = vmatprep.subr.mxu0 0.0
    %1598 = vmatpush1.msra.mxu0 0.0
    %1599 = vmatprep.subr.mxu0 0.0
    %1600 = vmatpush1.msra.mxu0 0.0
    %1601 = vmatprep.subr.mxu0 0.0
    %1602 = vmatpush1.msra.mxu0 0.0
    %1603 = vmatprep.subr.mxu0 0.0
    %1604 = vmatpush1.msra.mxu0 0.0
    %1605 = vmatprep.subr.mxu0 0.0
    %1606 = vmatpush1.msra.mxu0 0.0
    %1607 = vmatprep.subr.mxu0 0.0
    %1608 = vmatpush1.msra.mxu0 0.0
    %1609 = vmatprep.subr.mxu0 0.0
    %1610 = vmatpush1.msra.mxu0 0.0
    %1611 = vmatprep.subr.mxu0 0.0
    %1612 = vmatpush1.msra.mxu0 0.0
    %1613 = vmatprep.subr.mxu0 0.0
    %1614 = vmatpush1.msra.mxu0 0.0
    %1615 = vmatprep.subr.mxu0 0.0
    %1616 = vmatpush1.msra.mxu0 0.0
    %1617 = vmatprep.subr.mxu0 0.0
    %1618 = vmatpush1.msra.mxu0 0.0
    %1619 = vmatprep.subr.mxu0 0.0
    %1620 = vmatpush1.msra.mxu0 0.0
    %1621 = vmatprep.subr.mxu0 0.0
    %1622 = vmatpush1.msra.mxu0 0.0
    %1623 = vmatprep.subr.mxu0 0.0
    %1624 = vmatpush1.msra.mxu0 0.0
    %1625 = vmatprep.subr.mxu0 0.0
    %1626 = vmatpush1.msra.mxu0 0.0
    %1627 = vmatprep.subr.mxu0 0.0
    %1628 = vmatpush1.msra.mxu0 0.0
    %1629 = vmatprep.subr.mxu0 0.0
    %1630 = vmatpush1.msra.mxu0 0.0
    %1631 = vmatprep.subr.mxu0 0.0
    %1632 = vmatpush1.msra.mxu0 0.0
    %1633 = vmatprep.subr.mxu0 0.0
    %1634 = vmatpush1.msra.mxu0 0.0
    %1635 = vmatprep.subr.mxu0 0.0
    %1636 = vmatpush1.msra.mxu0 0.0
    %1637 = vmatprep.subr.mxu0 0.0
    %1638 = vmatpush1.msra.mxu0 0.0
    %1639 = vmatprep.mubr.f32.mxu0 0.0
    %1640 = vmatmul.mubr.f32.gmra.mrb[0].mxu0 %v1503
    %v1641 = vpop.f32.mrb[0].mxu0
    %v1642 = vadd.f32 0.0, %v1641
    %v1643 = vpop.f32.mrb[0].mxu0
    %1644 = vdwg.mxu0
    %1645 = vmatprep.subr.mxu0 0.0
    %1646 = vmatpush1.msra.mxu0 %v41
    %1647 = vmatprep.subr.mxu0 0.0
    %1648 = vmatpush1.msra.mxu0 %v42
    %1649 = vmatprep.subr.mxu0 0.0
    %1650 = vmatpush1.msra.mxu0 %v43
    %1651 = vmatprep.subr.mxu0 0.0
    %1652 = vmatpush1.msra.mxu0 %v44
    %1653 = vmatprep.subr.mxu0 0.0
    %1654 = vmatpush1.msra.mxu0 0.0
    %1655 = vmatprep.subr.mxu0 0.0
    %1656 = vmatpush1.msra.mxu0 0.0
    %1657 = vmatprep.subr.mxu0 0.0
    %1658 = vmatpush1.msra.mxu0 0.0
    %1659 = vmatprep.subr.mxu0 0.0
    %1660 = vmatpush1.msra.mxu0 0.0
    %1661 = vmatprep.subr.mxu0 0.0
    %1662 = vmatpush1.msra.mxu0 0.0
    %1663 = vmatprep.subr.mxu0 0.0
    %1664 = vmatpush1.msra.mxu0 0.0
    %1665 = vmatprep.subr.mxu0 0.0
    %1666 = vmatpush1.msra.mxu0 0.0
    %1667 = vmatprep.subr.mxu0 0.0
    %1668 = vmatpush1.msra.mxu0 0.0
    %1669 = vmatprep.subr.mxu0 0.0
    %1670 = vmatpush1.msra.mxu0 0.0
    %1671 = vmatprep.subr.mxu0 0.0
    %1672 = vmatpush1.msra.mxu0 0.0
    %1673 = vmatprep.subr.mxu0 0.0
    %1674 = vmatpush1.msra.mxu0 0.0
    %1675 = vmatprep.subr.mxu0 0.0
    %1676 = vmatpush1.msra.mxu0 0.0
    %1677 = vmatprep.subr.mxu0 0.0
    %1678 = vmatpush1.msra.mxu0 0.0
    %1679 = vmatprep.subr.mxu0 0.0
    %1680 = vmatpush1.msra.mxu0 0.0
    %1681 = vmatprep.subr.mxu0 0.0
    %1682 = vmatpush1.msra.mxu0 0.0
    %1683 = vmatprep.subr.mxu0 0.0
    %1684 = vmatpush1.msra.mxu0 0.0
    %1685 = vmatprep.subr.mxu0 0.0
    %1686 = vmatpush1.msra.mxu0 0.0
    %1687 = vmatprep.subr.mxu0 0.0
    %1688 = vmatpush1.msra.mxu0 0.0
    %1689 = vmatprep.subr.mxu0 0.0
    %1690 = vmatpush1.msra.mxu0 0.0
    %1691 = vmatprep.subr.mxu0 0.0
    %1692 = vmatpush1.msra.mxu0 0.0
    %1693 = vmatprep.subr.mxu0 0.0
    %1694 = vmatpush1.msra.mxu0 0.0
    %1695 = vmatprep.subr.mxu0 0.0
    %1696 = vmatpush1.msra.mxu0 0.0
    %1697 = vmatprep.subr.mxu0 0.0
    %1698 = vmatpush1.msra.mxu0 0.0
    %1699 = vmatprep.subr.mxu0 0.0
    %1700 = vmatpush1.msra.mxu0 0.0
    %1701 = vmatprep.subr.mxu0 0.0
    %1702 = vmatpush1.msra.mxu0 0.0
    %1703 = vmatprep.subr.mxu0 0.0
    %1704 = vmatpush1.msra.mxu0 0.0
    %1705 = vmatprep.subr.mxu0 0.0
    %1706 = vmatpush1.msra.mxu0 0.0
    %1707 = vmatprep.subr.mxu0 0.0
    %1708 = vmatpush1.msra.mxu0 0.0
    %1709 = vmatprep.mubr.f32.mxu0 0.0
    %1710 = vmatmul.mubr.f32.gmra.mrb[0].mxu0 %v1503
    %v1711 = vpop.f32.mrb[0].mxu0
    %v1712 = vadd.f32 %v195, %v1711
    %v1713 = vpop.f32.mrb[0].mxu0
    %1714 = vdwg.mxu0
    %s1715 = scalar_lea.vmem %s0, 48
    %v1716 = vld [vmem:[%s1715] sm:$0xff]
    %v1717 = vadd.f32 %v1716, %v1572
    %v1718 = vxor.u32 %v1717, 2147483648
    %v1719 = vmul.f32 %v1718, 1.442695
    %v1720 = vpow.pop %v1719
    %v1721 = vadd.f32 %v1720, 1.0
    %v1722 = vrcp.pop %v1721
    %v1723 = vmul.f32 1.0, %v1722
    %s1724 = scalar_lea.vmem %s1, 48
    %v1725 = vld [vmem:[%s1724] sm:$0xff]
    %v1726 = vadd.f32 %v1725, %v1642
    %v1727 = vxor.u32 %v1726, 2147483648
    %v1728 = vmul.f32 %v1727, 1.442695
    %v1729 = vpow.pop %v1728
    %v1730 = vadd.f32 %v1729, 1.0
    %v1731 = vrcp.pop %v1730
    %v1732 = vmul.f32 1.0, %v1731
    %s1733 = scalar_lea.vmem %s2, 48
    %v1734 = vld [vmem:[%s1733] sm:$0xff]
    %v1735 = vmul.f32 %v1723, %v1712
    %v1736 = vadd.f32 %v1734, %v1735
    %v1737 = vtanh.pop %v1736
    %v1738 = vsub.f32 1.0, %v1732
    %v1739 = vmul.f32 %v1738, %v1737
    %v1740 = vmul.f32 %v1732, %v1499
    %v1741 = vadd.f32 %v1739, %v1740
    %s1742 = scalar_lea.vmem [#allocation2], 48
    %1743 = vst.msk [vmem:[%s1742] sm:$0xff] %vm47, %v1741
    %v1745 = vsel %vm47, %v1741, 0
    %1747 = vmatprep.subr.mxu0 0.0
    %1748 = vmatpush1.msra.mxu0 %v33
    %1749 = vmatprep.subr.mxu0 0.0
    %1750 = vmatpush1.msra.mxu0 %v34
    %1751 = vmatprep.subr.mxu0 0.0
    %1752 = vmatpush1.msra.mxu0 %v35
    %1753 = vmatprep.subr.mxu0 0.0
    %1754 = vmatpush1.msra.mxu0 %v36
    %1755 = vmatprep.subr.mxu0 0.0
    %1756 = vmatpush1.msra.mxu0 0.0
    %1757 = vmatprep.subr.mxu0 0.0
    %1758 = vmatpush1.msra.mxu0 0.0
    %1759 = vmatprep.subr.mxu0 0.0
    %1760 = vmatpush1.msra.mxu0 0.0
    %1761 = vmatprep.subr.mxu0 0.0
    %1762 = vmatpush1.msra.mxu0 0.0
    %1763 = vmatprep.subr.mxu0 0.0
    %1764 = vmatpush1.msra.mxu0 0.0
    %1765 = vmatprep.subr.mxu0 0.0
    %1766 = vmatpush1.msra.mxu0 0.0
    %1767 = vmatprep.subr.mxu0 0.0
    %1768 = vmatpush1.msra.mxu0 0.0
    %1769 = vmatprep.subr.mxu0 0.0
    %1770 = vmatpush1.msra.mxu0 0.0
    %1771 = vmatprep.subr.mxu0 0.0
    %1772 = vmatpush1.msra.mxu0 0.0
    %1773 = vmatprep.subr.mxu0 0.0
    %1774 = vmatpush1.msra.mxu0 0.0
    %1775 = vmatprep.subr.mxu0 0.0
    %1776 = vmatpush1.msra.mxu0 0.0
    %1777 = vmatprep.subr.mxu0 0.0
    %1778 = vmatpush1.msra.mxu0 0.0
    %1779 = vmatprep.subr.mxu0 0.0
    %1780 = vmatpush1.msra.mxu0 0.0
    %1781 = vmatprep.subr.mxu0 0.0
    %1782 = vmatpush1.msra.mxu0 0.0
    %1783 = vmatprep.subr.mxu0 0.0
    %1784 = vmatpush1.msra.mxu0 0.0
    %1785 = vmatprep.subr.mxu0 0.0
    %1786 = vmatpush1.msra.mxu0 0.0
    %1787 = vmatprep.subr.mxu0 0.0
    %1788 = vmatpush1.msra.mxu0 0.0
    %1789 = vmatprep.subr.mxu0 0.0
    %1790 = vmatpush1.msra.mxu0 0.0
    %1791 = vmatprep.subr.mxu0 0.0
    %1792 = vmatpush1.msra.mxu0 0.0
    %1793 = vmatprep.subr.mxu0 0.0
    %1794 = vmatpush1.msra.mxu0 0.0
    %1795 = vmatprep.subr.mxu0 0.0
    %1796 = vmatpush1.msra.mxu0 0.0
    %1797 = vmatprep.subr.mxu0 0.0
    %1798 = vmatpush1.msra.mxu0 0.0
    %1799 = vmatprep.subr.mxu0 0.0
    %1800 = vmatpush1.msra.mxu0 0.0
    %1801 = vmatprep.subr.mxu0 0.0
    %1802 = vmatpush1.msra.mxu0 0.0
    %1803 = vmatprep.subr.mxu0 0.0
    %1804 = vmatpush1.msra.mxu0 0.0
    %1805 = vmatprep.subr.mxu0 0.0
    %1806 = vmatpush1.msra.mxu0 0.0
    %1807 = vmatprep.subr.mxu0 0.0
    %1808 = vmatpush1.msra.mxu0 0.0
    %1809 = vmatprep.subr.mxu0 0.0
    %1810 = vmatpush1.msra.mxu0 0.0
    %1811 = vmatprep.mubr.f32.mxu0 0.0
    %1812 = vmatmul.mubr.f32.gmra.mrb[0].mxu0 %v1745
    %v1813 = vpop.f32.mrb[0].mxu0
    %v1814 = vadd.f32 0.0, %v1813
    %v1815 = vpop.f32.mrb[0].mxu0
    %1816 = vdwg.mxu0
    %1817 = vmatprep.subr.mxu0 0.0
    %1818 = vmatpush1.msra.mxu0 %v37
    %1819 = vmatprep.subr.mxu0 0.0
    %1820 = vmatpush1.msra.mxu0 %v38
    %1821 = vmatprep.subr.mxu0 0.0
    %1822 = vmatpush1.msra.mxu0 %v39
    %1823 = vmatprep.subr.mxu0 0.0
    %1824 = vmatpush1.msra.mxu0 %v40
    %1825 = vmatprep.subr.mxu0 0.0
    %1826 = vmatpush1.msra.mxu0 0.0
    %1827 = vmatprep.subr.mxu0 0.0
    %1828 = vmatpush1.msra.mxu0 0.0
    %1829 = vmatprep.subr.mxu0 0.0
    %1830 = vmatpush1.msra.mxu0 0.0
    %1831 = vmatprep.subr.mxu0 0.0
    %1832 = vmatpush1.msra.mxu0 0.0
    %1833 = vmatprep.subr.mxu0 0.0
    %1834 = vmatpush1.msra.mxu0 0.0
    %1835 = vmatprep.subr.mxu0 0.0
    %1836 = vmatpush1.msra.mxu0 0.0
    %1837 = vmatprep.subr.mxu0 0.0
    %1838 = vmatpush1.msra.mxu0 0.0
    %1839 = vmatprep.subr.mxu0 0.0
    %1840 = vmatpush1.msra.mxu0 0.0
    %1841 = vmatprep.subr.mxu0 0.0
    %1842 = vmatpush1.msra.mxu0 0.0
    %1843 = vmatprep.subr.mxu0 0.0
    %1844 = vmatpush1.msra.mxu0 0.0
    %1845 = vmatprep.subr.mxu0 0.0
    %1846 = vmatpush1.msra.mxu0 0.0
    %1847 = vmatprep.subr.mxu0 0.0
    %1848 = vmatpush1.msra.mxu0 0.0
    %1849 = vmatprep.subr.mxu0 0.0
    %1850 = vmatpush1.msra.mxu0 0.0
    %1851 = vmatprep.subr.mxu0 0.0
    %1852 = vmatpush1.msra.mxu0 0.0
    %1853 = vmatprep.subr.mxu0 0.0
    %1854 = vmatpush1.msra.mxu0 0.0
    %1855 = vmatprep.subr.mxu0 0.0
    %1856 = vmatpush1.msra.mxu0 0.0
    %1857 = vmatprep.subr.mxu0 0.0
    %1858 = vmatpush1.msra.mxu0 0.0
    %1859 = vmatprep.subr.mxu0 0.0
    %1860 = vmatpush1.msra.mxu0 0.0
    %1861 = vmatprep.subr.mxu0 0.0
    %1862 = vmatpush1.msra.mxu0 0.0
    %1863 = vmatprep.subr.mxu0 0.0
    %1864 = vmatpush1.msra.mxu0 0.0
    %1865 = vmatprep.subr.mxu0 0.0
    %1866 = vmatpush1.msra.mxu0 0.0
    %1867 = vmatprep.subr.mxu0 0.0
    %1868 = vmatpush1.msra.mxu0 0.0
    %1869 = vmatprep.subr.mxu0 0.0
    %1870 = vmatpush1.msra.mxu0 0.0
    %1871 = vmatprep.subr.mxu0 0.0
    %1872 = vmatpush1.msra.mxu0 0.0
    %1873 = vmatprep.subr.mxu0 0.0
    %1874 = vmatpush1.msra.mxu0 0.0
    %1875 = vmatprep.subr.mxu0 0.0
    %1876 = vmatpush1.msra.mxu0 0.0
    %1877 = vmatprep.subr.mxu0 0.0
    %1878 = vmatpush1.msra.mxu0 0.0
    %1879 = vmatprep.subr.mxu0 0.0
    %1880 = vmatpush1.msra.mxu0 0.0
    %1881 = vmatprep.mubr.f32.mxu0 0.0
    %1882 = vmatmul.mubr.f32.gmra.mrb[0].mxu0 %v1745
    %v1883 = vpop.f32.mrb[0].mxu0
    %v1884 = vadd.f32 0.0, %v1883
    %v1885 = vpop.f32.mrb[0].mxu0
    %1886 = vdwg.mxu0
    %1887 = vmatprep.subr.mxu0 0.0
    %1888 = vmatpush1.msra.mxu0 %v41
    %1889 = vmatprep.subr.mxu0 0.0
    %1890 = vmatpush1.msra.mxu0 %v42
    %1891 = vmatprep.subr.mxu0 0.0
    %1892 = vmatpush1.msra.mxu0 %v43
    %1893 = vmatprep.subr.mxu0 0.0
    %1894 = vmatpush1.msra.mxu0 %v44
    %1895 = vmatprep.subr.mxu0 0.0
    %1896 = vmatpush1.msra.mxu0 0.0
    %1897 = vmatprep.subr.mxu0 0.0
    %1898 = vmatpush1.msra.mxu0 0.0
    %1899 = vmatprep.subr.mxu0 0.0
    %1900 = vmatpush1.msra.mxu0 0.0
    %1901 = vmatprep.subr.mxu0 0.0
    %1902 = vmatpush1.msra.mxu0 0.0
    %1903 = vmatprep.subr.mxu0 0.0
    %1904 = vmatpush1.msra.mxu0 0.0
    %1905 = vmatprep.subr.mxu0 0.0
    %1906 = vmatpush1.msra.mxu0 0.0
    %1907 = vmatprep.subr.mxu0 0.0
    %1908 = vmatpush1.msra.mxu0 0.0
    %1909 = vmatprep.subr.mxu0 0.0
    %1910 = vmatpush1.msra.mxu0 0.0
    %1911 = vmatprep.subr.mxu0 0.0
    %1912 = vmatpush1.msra.mxu0 0.0
    %1913 = vmatprep.subr.mxu0 0.0
    %1914 = vmatpush1.msra.mxu0 0.0
    %1915 = vmatprep.subr.mxu0 0.0
    %1916 = vmatpush1.msra.mxu0 0.0
    %1917 = vmatprep.subr.mxu0 0.0
    %1918 = vmatpush1.msra.mxu0 0.0
    %1919 = vmatprep.subr.mxu0 0.0
    %1920 = vmatpush1.msra.mxu0 0.0
    %1921 = vmatprep.subr.mxu0 0.0
    %1922 = vmatpush1.msra.mxu0 0.0
    %1923 = vmatprep.subr.mxu0 0.0
    %1924 = vmatpush1.msra.mxu0 0.0
    %1925 = vmatprep.subr.mxu0 0.0
    %1926 = vmatpush1.msra.mxu0 0.0
    %1927 = vmatprep.subr.mxu0 0.0
    %1928 = vmatpush1.msra.mxu0 0.0
    %1929 = vmatprep.subr.mxu0 0.0
    %1930 = vmatpush1.msra.mxu0 0.0
    %1931 = vmatprep.subr.mxu0 0.0
    %1932 = vmatpush1.msra.mxu0 0.0
    %1933 = vmatprep.subr.mxu0 0.0
    %1934 = vmatpush1.msra.mxu0 0.0
    %1935 = vmatprep.subr.mxu0 0.0
    %1936 = vmatpush1.msra.mxu0 0.0
    %1937 = vmatprep.subr.mxu0 0.0
    %1938 = vmatpush1.msra.mxu0 0.0
    %1939 = vmatprep.subr.mxu0 0.0
    %1940 = vmatpush1.msra.mxu0 0.0
    %1941 = vmatprep.subr.mxu0 0.0
    %1942 = vmatpush1.msra.mxu0 0.0
    %1943 = vmatprep.subr.mxu0 0.0
    %1944 = vmatpush1.msra.mxu0 0.0
    %1945 = vmatprep.subr.mxu0 0.0
    %1946 = vmatpush1.msra.mxu0 0.0
    %1947 = vmatprep.subr.mxu0 0.0
    %1948 = vmatpush1.msra.mxu0 0.0
    %1949 = vmatprep.subr.mxu0 0.0
    %1950 = vmatpush1.msra.mxu0 0.0
    %1951 = vmatprep.mubr.f32.mxu0 0.0
    %1952 = vmatmul.mubr.f32.gmra.mrb[0].mxu0 %v1745
    %v1953 = vpop.f32.mrb[0].mxu0
    %v1954 = vadd.f32 %v195, %v1953
    %v1955 = vpop.f32.mrb[0].mxu0
    %1956 = vdwg.mxu0
    %s1957 = scalar_lea.vmem %s0, 56
    %v1958 = vld [vmem:[%s1957] sm:$0xff]
    %v1959 = vadd.f32 %v1958, %v1814
    %v1960 = vxor.u32 %v1959, 2147483648
    %v1961 = vmul.f32 %v1960, 1.442695
    %v1962 = vpow.pop %v1961
    %v1963 = vadd.f32 %v1962, 1.0
    %v1964 = vrcp.pop %v1963
    %v1965 = vmul.f32 1.0, %v1964
    %s1966 = scalar_lea.vmem %s1, 56
    %v1967 = vld [vmem:[%s1966] sm:$0xff]
    %v1968 = vadd.f32 %v1967, %v1884
    %v1969 = vxor.u32 %v1968, 2147483648
    %v1970 = vmul.f32 %v1969, 1.442695
    %v1971 = vpow.pop %v1970
    %v1972 = vadd.f32 %v1971, 1.0
    %v1973 = vrcp.pop %v1972
    %v1974 = vmul.f32 1.0, %v1973
    %s1975 = scalar_lea.vmem %s2, 56
    %v1976 = vld [vmem:[%s1975] sm:$0xff]
    %v1977 = vmul.f32 %v1965, %v1954
    %v1978 = vadd.f32 %v1976, %v1977
    %v1979 = vtanh.pop %v1978
    %v1980 = vsub.f32 1.0, %v1974
    %v1981 = vmul.f32 %v1980, %v1979
    %v1982 = vmul.f32 %v1974, %v1741
    %v1983 = vadd.f32 %v1981, %v1982
    %s1984 = scalar_lea.vmem [#allocation2], 56
    %1985 = vst.msk [vmem:[%s1984] sm:$0xff] %vm47, %v1983
    %1986 = vst.msk [vmem:[#allocation4] sm:$0xff] %vm47, %v1983
    // Predicated region
    $region34: #{encoder_rnn_forward.3} parent=1 // pred_check
      _
    $region35: #{encoder_rnn_forward.3} parent=1 // pred_check_branch
      %1988 = sbr.rel (0) target = $region37
    $region36: #{encoder_rnn_forward.3} parent=1 // pred_region
      %s1990 = ssub.s32 1024, 1024
      %1991 = vsyncadd [#allocation3], %s1990
      %s1992 = sshll.u32 [#allocation2], 4
      %s1993 = int_to_ptr.vmem [resolvable:$true] %s1992
      %1998 = dma.vmem_to_hbm [thread:$0]  %s1993, 1024, %s8, [#allocation3], 128, 128, 8
    $region37: #{encoder_rnn_forward.3} parent=1 // pred_fallthru
      _
    // Predicated region
    $region38: #{encoder_rnn_forward.3} parent=1 // pred_check
      _
    $region39: #{encoder_rnn_forward.3} parent=1 // pred_check_branch
      %2000 = sbr.rel (0) target = $region41
    $region40: #{encoder_rnn_forward.3} parent=1 // pred_region
      %s2002 = ssub.s32 128, 128
      %2003 = vsyncadd [#allocation5], %s2002
      %s2005 = sshll.u32 [#allocation4], 4
      %s2006 = int_to_ptr.vmem [resolvable:$true] %s2005
      %2008 = dma.vmem_to_hbm [thread:$0]  %s2006, 128, %s9, [#allocation5]
    $region41: #{encoder_rnn_forward.3} parent=1 // pred_fallthru
      _
    // Predicated region
    $region42: #{encoder_rnn_forward.3} parent=1 // pred_check
      _
    $region43: #{encoder_rnn_forward.3} parent=1 // pred_check_branch
      %2010 = sbr.rel (0) target = $region45
    $region44: #{encoder_rnn_forward.3} parent=1 // pred_region
      %2011 = dma.done [#allocation3], 1024
    $region45: #{encoder_rnn_forward.3} parent=1 // pred_fallthru
      _
    // Predicated region
    $region46: #{encoder_rnn_forward.3} parent=1 // pred_check
      _
    $region47: #{encoder_rnn_forward.3} parent=1 // pred_check_branch
      %2013 = sbr.rel (0) target = $region49
    $region48: #{encoder_rnn_forward.3} parent=1 // pred_region
      %2014 = dma.done [#allocation5], 128
    $region49: #{encoder_rnn_forward.3} parent=1 // pred_fallthru
      _
    %2015 = vsyncpa [#allocation3], 1
    %2016 = vsyncpa [#allocation5], 1

</llo_original>
